<compile_context>
chip_gen: v5e
topology: v5e:2x2
jax: 0.10.0
libtpu: 0.0.40
codegen_flags: <defaults>
</compile_context>

<pallas_src>
import jax
import jax.numpy as jnp
from jax import lax
from jax.experimental import pallas as pl
from jax.experimental.pallas import tpu as pltpu

EPS = 1e-5  # PyTorch LayerNorm default eps


def _ref_encoder_kernel(x_ref, wc1_ref, bc1_ref, g1_ref, be1_ref,
                        wc2_ref, bc2_ref, g2_ref, be2_ref,
                        ef_ref, el_ref, sred_ref, sbc_ref, wlin_ref, bl_ref,
                        o_ref):
    h = x_ref[...]                       # (L, D): packed (batch*time, channel) slab
    L = h.shape[0]
    bt = sred_ref.shape[0]               # segments per slab (static at trace time)
    ef = ef_ref[...]                     # (L, 1): 0 at each segment's first row
    el = el_ref[...]                     # (L, 1): 0 at each segment's last row

    def conv_relu_ln(h, wc_ref, bc_ref, g_ref, be_ref):
        # Conv1d(dim, dim, 3, padding=1): +-1 row shifts on the XLU (sublane roll)
        # + per-segment boundary masks on the VPU, then three accumulating MXU
        # matmuls (no (L, 3D) concat temp / extra store traffic).
        h_m1 = pltpu.roll(h, 1, 0) * ef          # row l-1, zeroed at segment starts
        h_p1 = pltpu.roll(h, L - 1, 0) * el      # row l+1, zeroed at segment ends
        y = (jnp.dot(h_m1, wc_ref[0], preferred_element_type=jnp.float32)
             + jnp.dot(h,    wc_ref[1], preferred_element_type=jnp.float32)
             + jnp.dot(h_p1, wc_ref[2], preferred_element_type=jnp.float32)
             + bc_ref[...])
        y = jnp.maximum(y, 0.0)                  # ReLU
        # LayerNorm over the time axis (rows), independently per batch segment,
        # with factored reduce-then-broadcast statistics (O(L*Bt), not O(L^2)).
        if bt == 1:
            ey = jnp.mean(y, axis=0, keepdims=True)             # (1, D)
            ey2 = jnp.mean(y * y, axis=0, keepdims=True)        # (1, D)
            rstd = lax.rsqrt(ey2 - ey * ey + EPS)               # biased var (PyTorch)
            return (y - ey) * rstd * g_ref[...] + be_ref[...]
        sred = sred_ref[...]                                    # (Bt, L) indicator / T
        sbc = sbc_ref[...]                                      # (L, Bt) indicator
        ey = jnp.dot(sred, y, preferred_element_type=jnp.float32)        # (Bt, D)
        ey2 = jnp.dot(sred, y * y, preferred_element_type=jnp.float32)   # (Bt, D)
        rstd = lax.rsqrt(ey2 - ey * ey + EPS)                            # (Bt, D)
        mu_f = jnp.dot(sbc, ey, preferred_element_type=jnp.float32)      # (L, D)
        rstd_f = jnp.dot(sbc, rstd, preferred_element_type=jnp.float32)  # (L, D)
        return (y - mu_f) * rstd_f * g_ref[...] + be_ref[...]

    h = conv_relu_ln(h, wc1_ref, bc1_ref, g1_ref, be1_ref)
    h = conv_relu_ln(h, wc2_ref, bc2_ref, g2_ref, be2_ref)
    # Linear(dim, 1) over the time axis, all segments at once:
    #   out[b, d] = sum_l wlin[b, l] * h[l, d]   (natural (Bt,L)x(L,D) matmul,
    # no transpose of the activation slab; channel axis is the minor/lane axis).
    out = jnp.dot(wlin_ref[...], h, preferred_element_type=jnp.float32) + bl_ref[0, 0]
    o_ref[0] = out                       # (Bt, D)


def ref_encoder(x, params):
    """x: (B, T, D) float32 with T == D.  Returns (B, 1, D), matching PyTorch."""
    w1, b1, g1, be1, w2, b2, g2, be2, wl, bl = params
    B, T, D = x.shape
    assert T == D, "requires seq == dim (LayerNorm/Linear act on the length axis)"

    # --- slab sizing: Bt segments per grid step, stacked along the sublane axis.
    # Target ~512 packed rows per step (amortize ~0.35us/step pipeline overhead),
    # keep >= 2 grid steps when B >= 2 (v7x dual-TensorCore sharding of the
    # "parallel" axis), and keep L = Bt*T a multiple of the 8-row sublane tile.
    if T % 8 == 0:
        bt_cap = max(1, min(B, 512 // T)) if T <= 512 else 1
        Bt = max(1, min(bt_cap, -(-B // 2)))
    else:
        Bt = B                         # odd T: one full-batch slab (block == array)
    n_steps = -(-B // Bt)
    B_pad = n_steps * Bt
    L = Bt * T

    # --- input: pure view reshape, no transpose / HBM repack pass ---
    x_flat = x.reshape(B * T, D)
    if B_pad != B:
        x_flat = jnp.pad(x_flat, ((0, (B_pad - B) * T), (0, 0)))

    # --- constant plumbing (built once, outside the grid) ---
    wc1 = jnp.transpose(w1, (2, 1, 0))            # (3, D, D): wc1[k, i, o] = w1[o, i, k]
    wc2 = jnp.transpose(w2, (2, 1, 0))
    bc1, bc2 = b1.reshape(1, D), b2.reshape(1, D)
    g1c = jnp.tile(g1.reshape(T, 1), (Bt, 1))     # (L, 1): LN gamma per time position
    be1c = jnp.tile(be1.reshape(T, 1), (Bt, 1))
    g2c = jnp.tile(g2.reshape(T, 1), (Bt, 1))
    be2c = jnp.tile(be2.reshape(T, 1), (Bt, 1))

    row = jnp.arange(L)
    t = row % T
    seg = row // T
    ef = (t != 0).astype(jnp.float32).reshape(L, 1)        # kill wrap at segment start
    el = (t != T - 1).astype(jnp.float32).reshape(L, 1)    # kill wrap at segment end
    onehot = (seg[:, None] == jnp.arange(Bt)[None, :]).astype(jnp.float32)  # (L, Bt)
    sred = onehot.T / T                                                     # (Bt, L)
    sbc = onehot                                                            # (L, Bt)
    wlin = onehot.T * jnp.tile(wl.reshape(T), Bt)[None, :]                  # (Bt, L)
    blr = bl.reshape(1, 1)

    def full(shape):
        n = len(shape)
        return pl.BlockSpec(shape, lambda i, _n=n: (0,) * _n)

    # Rough per-step VMEM estimate (double-buffered blocks + streamed temporaries);
    # cap at 64 MiB so it stays valid on v7x's smaller VMEM.  For D >= ~768 also
    # single-buffer the grid-invariant (3,D,D) weight specs (pipeline_mode).
    fb = 4
    blk_bytes = fb * (L * D + 2 * 3 * D * D + 2 * D + 6 * L + 3 * Bt * L)
    vmem_est = 2 * blk_bytes + fb * 8 * L * D
    vmem_limit = int(min(max(vmem_est, 32 * 1024 * 1024), 64 * 1024 * 1024))

    out = pl.pallas_call(
        _ref_encoder_kernel,
        out_shape=jax.ShapeDtypeStruct((n_steps, Bt, D), jnp.float32),
        grid=(n_steps,),
        in_specs=[
            pl.BlockSpec((L, D), lambda i: (i, 0)),          # packed x slab
            full((3, D, D)), full((1, D)), full((L, 1)), full((L, 1)),
            full((3, D, D)), full((1, D)), full((L, 1)), full((L, 1)),
            full((L, 1)), full((L, 1)),                      # conv boundary masks
            full((Bt, L)), full((L, Bt)),                    # LN reduce / broadcast
            full((Bt, L)),                                   # segmented linear weight
            pl.BlockSpec(memory_space=pltpu.MemorySpace.SMEM),  # linear bias scalar
        ],
        out_specs=pl.BlockSpec((1, Bt, D), lambda i: (i, 0, 0)),
        compiler_params=pltpu.CompilerParams(
            dimension_semantics=("parallel",),
            vmem_limit_bytes=vmem_limit),
    )(x_flat, wc1, bc1, g1c, be1c, wc2, bc2, g2c, be2c,
      ef, el, sred, sbc, wlin, blr)

    out = out.reshape(B_pad, D)[:B]                          # (B, D)
    return out[:, None, :]                                   # (B, 1, D)


def reference(x, params):
    """Pure-JAX reference mirroring the PyTorch forward."""
    w1, b1, g1, be1, w2, b2, g2, be2, wl, bl = params
    h = jnp.transpose(x, (0, 2, 1))                 # (B, D, T)

    def conv1d(h, w, b):
        T = h.shape[-1]
        hp = jnp.pad(h, ((0, 0), (0, 0), (1, 1)))
        out = sum(jnp.einsum('oi,bil->bol', w[:, :, k], hp[:, :, k:k + T]) for k in range(3))
        return out + b[None, :, None]

    def ln(y, g, be):
        mu = jnp.mean(y, axis=-1, keepdims=True)
        var = jnp.mean((y - mu) ** 2, axis=-1, keepdims=True)
        return (y - mu) / jnp.sqrt(var + EPS) * g + be

    h = ln(jax.nn.relu(conv1d(h, w1, b1)), g1, be1)
    h = ln(jax.nn.relu(conv1d(h, w2, b2)), g2, be2)
    out = jnp.einsum('bol,l->bo', h, wl[0]) + bl[0]
    return jnp.transpose(out[:, :, None], (0, 2, 1))


if __name__ == "__main__":
    # TODO(synk): only the conv->relu->LN stack + linear head is kernelized here; the
    # rest of EnhancedEmbeddingAdapter (LSTM, MHA, interpolate, length regulator) is
    # out of scope for this kernel.
    B, T, D = 5, 16, 16                             # seq == dim (required by the module);
                                                    # B=5 exercises padding + multi-segment slabs
    keys = jax.random.split(jax.random.PRNGKey(0), 11)
    w1 = 0.2 * jax.random.normal(keys[0], (D, D, 3), jnp.float32)   # Conv1d weight (co, ci, k)
    b1 = 0.1 * jax.random.normal(keys[1], (D,), jnp.float32)
    g1 = 1.0 + 0.1 * jax.random.normal(keys[2], (D,), jnp.float32)  # LayerNorm gamma
    be1 = 0.1 * jax.random.normal(keys[3], (D,), jnp.float32)       # LayerNorm beta
    w2 = 0.2 * jax.random.normal(keys[4], (D, D, 3), jnp.float32)
    b2 = 0.1 * jax.random.normal(keys[5], (D,), jnp.float32)
    g2 = 1.0 + 0.1 * jax.random.normal(keys[6], (D,), jnp.float32)
    be2 = 0.1 * jax.random.normal(keys[7], (D,), jnp.float32)
    wl = 0.2 * jax.random.normal(keys[8], (1, D), jnp.float32)      # Linear(dim, 1) weight
    bl = 0.1 * jax.random.normal(keys[9], (1,), jnp.float32)
    x = jax.random.normal(keys[10], (B, T, D), jnp.float32)
    params = (w1, b1, g1, be1, w2, b2, g2, be2, wl, bl)

    out = jax.block_until_ready(ref_encoder(x, params))
    ref = reference(x, params)
    assert out.shape == (B, 1, D), out.shape
    err = float(jnp.max(jnp.abs(out - ref)))
    assert jnp.allclose(out, ref, atol=1e-4, rtol=1e-4), f"max abs err {err}"
    print("KERNEL_OK")
</pallas_src>

<mosaic_0001>
module attributes {stable_mosaic.version = 11 : i64} {
  func.func @_ref_encoder_kernel(%arg0: i32, %arg1: memref<48x16xf32, #tpu.memory_space<vmem>>, %arg2: memref<3x16x16xf32, #tpu.memory_space<vmem>>, %arg3: memref<1x16xf32, #tpu.memory_space<vmem>>, %arg4: memref<48x1xf32, #tpu.memory_space<vmem>>, %arg5: memref<48x1xf32, #tpu.memory_space<vmem>>, %arg6: memref<3x16x16xf32, #tpu.memory_space<vmem>>, %arg7: memref<1x16xf32, #tpu.memory_space<vmem>>, %arg8: memref<48x1xf32, #tpu.memory_space<vmem>>, %arg9: memref<48x1xf32, #tpu.memory_space<vmem>>, %arg10: memref<48x1xf32, #tpu.memory_space<vmem>>, %arg11: memref<48x1xf32, #tpu.memory_space<vmem>>, %arg12: memref<3x48xf32, #tpu.memory_space<vmem>>, %arg13: memref<48x3xf32, #tpu.memory_space<vmem>>, %arg14: memref<3x48xf32, #tpu.memory_space<vmem>>, %arg15: memref<1x1xf32, #tpu.memory_space<smem>>, %arg16: memref<1x3x16xf32, #tpu.memory_space<vmem>>) attributes {dimension_semantics = [#tpu.dimension_semantics<parallel>], iteration_bounds = array<i64: 2>, scalar_prefetch = 0 : i64, scratch_operands = 0 : i64, tpu.core_type = #tpu.core_type<tc>, window_params = [{transform_indices = @transform_0, window_bounds = array<i64: 48, 16>}, {pipeline_mode = #tpu.pipeline_mode<synchronous>, transform_indices = @transform_1, window_bounds = array<i64: 3, 16, 16>}, {pipeline_mode = #tpu.pipeline_mode<synchronous>, transform_indices = @transform_2, window_bounds = array<i64: 1, 16>}, {pipeline_mode = #tpu.pipeline_mode<synchronous>, transform_indices = @transform_3, window_bounds = array<i64: 48, 1>}, {pipeline_mode = #tpu.pipeline_mode<synchronous>, transform_indices = @transform_4, window_bounds = array<i64: 48, 1>}, {pipeline_mode = #tpu.pipeline_mode<synchronous>, transform_indices = @transform_5, window_bounds = array<i64: 3, 16, 16>}, {pipeline_mode = #tpu.pipeline_mode<synchronous>, transform_indices = @transform_6, window_bounds = array<i64: 1, 16>}, {pipeline_mode = #tpu.pipeline_mode<synchronous>, transform_indices = @transform_7, window_bounds = array<i64: 48, 1>}, {pipeline_mode = #tpu.pipeline_mode<synchronous>, transform_indices = @transform_8, window_bounds = array<i64: 48, 1>}, {pipeline_mode = #tpu.pipeline_mode<synchronous>, transform_indices = @transform_9, window_bounds = array<i64: 48, 1>}, {pipeline_mode = #tpu.pipeline_mode<synchronous>, transform_indices = @transform_10, window_bounds = array<i64: 48, 1>}, {pipeline_mode = #tpu.pipeline_mode<synchronous>, transform_indices = @transform_11, window_bounds = array<i64: 3, 48>}, {pipeline_mode = #tpu.pipeline_mode<synchronous>, transform_indices = @transform_12, window_bounds = array<i64: 48, 3>}, {pipeline_mode = #tpu.pipeline_mode<synchronous>, transform_indices = @transform_13, window_bounds = array<i64: 3, 48>}, {transform_indices = @transform_14, window_bounds = array<i64: 1, 1>}, {transform_indices = @transform_15, window_bounds = array<i64: 1, 3, 16>}]} {
    %c0 = arith.constant 0 : index
    %c0_0 = arith.constant 0 : index
    %0 = vector.load %arg1[%c0, %c0_0] : memref<48x16xf32, #tpu.memory_space<vmem>>, vector<48x16xf32>
    %c0_1 = arith.constant 0 : index
    %c0_2 = arith.constant 0 : index
    %1 = vector.load %arg10[%c0_1, %c0_2] : memref<48x1xf32, #tpu.memory_space<vmem>>, vector<48x1xf32>
    %c0_3 = arith.constant 0 : index
    %c0_4 = arith.constant 0 : index
    %2 = vector.load %arg11[%c0_3, %c0_4] : memref<48x1xf32, #tpu.memory_space<vmem>>, vector<48x1xf32>
    %c1_i32 = arith.constant 1 : i32
    %3 = tpu.dynamic_rotate %0 by %c1_i32 dim 0 : vector<48x16xf32>, i32 -> vector<48x16xf32>
    %4 = vector.broadcast %1 : vector<48x1xf32> to vector<48x16xf32>
    %5 = arith.mulf %3, %4 : vector<48x16xf32>
    %c47_i32 = arith.constant 47 : i32
    %6 = tpu.dynamic_rotate %0 by %c47_i32 dim 0 : vector<48x16xf32>, i32 -> vector<48x16xf32>
    %7 = vector.broadcast %2 : vector<48x1xf32> to vector<48x16xf32>
    %8 = arith.mulf %6, %7 : vector<48x16xf32>
    %c0_5 = arith.constant 0 : index
    %c0_6 = arith.constant 0 : index
    %c0_7 = arith.constant 0 : index
    %9 = vector.load %arg2[%c0_5, %c0_6, %c0_7] : memref<3x16x16xf32, #tpu.memory_space<vmem>>, vector<1x16x16xf32>
    %10 = vector.shape_cast %9 : vector<1x16x16xf32> to vector<16x16xf32>
    %cst = arith.constant dense<0.000000e+00> : vector<48x16xf32>
    %11 = tpu.matmul %5, %10, %cst {dimension_numbers = #tpu.dot_dimension_numbers<[1], [0], [0], [1], [0, 0, 1, 1], [], []>} : vector<48x16xf32>, vector<16x16xf32>, vector<48x16xf32> -> vector<48x16xf32>
    %c1 = arith.constant 1 : index
    %c0_8 = arith.constant 0 : index
    %c0_9 = arith.constant 0 : index
    %12 = vector.load %arg2[%c1, %c0_8, %c0_9] : memref<3x16x16xf32, #tpu.memory_space<vmem>>, vector<1x16x16xf32>
    %13 = vector.shape_cast %12 : vector<1x16x16xf32> to vector<16x16xf32>
    %cst_10 = arith.constant dense<0.000000e+00> : vector<48x16xf32>
    %14 = tpu.matmul %0, %13, %cst_10 {dimension_numbers = #tpu.dot_dimension_numbers<[1], [0], [0], [1], [0, 0, 1, 1], [], []>} : vector<48x16xf32>, vector<16x16xf32>, vector<48x16xf32> -> vector<48x16xf32>
    %15 = arith.addf %11, %14 : vector<48x16xf32>
    %c2 = arith.constant 2 : index
    %c0_11 = arith.constant 0 : index
    %c0_12 = arith.constant 0 : index
    %16 = vector.load %arg2[%c2, %c0_11, %c0_12] : memref<3x16x16xf32, #tpu.memory_space<vmem>>, vector<1x16x16xf32>
    %17 = vector.shape_cast %16 : vector<1x16x16xf32> to vector<16x16xf32>
    %cst_13 = arith.constant dense<0.000000e+00> : vector<48x16xf32>
    %18 = tpu.matmul %8, %17, %cst_13 {dimension_numbers = #tpu.dot_dimension_numbers<[1], [0], [0], [1], [0, 0, 1, 1], [], []>} : vector<48x16xf32>, vector<16x16xf32>, vector<48x16xf32> -> vector<48x16xf32>
    %19 = arith.addf %15, %18 : vector<48x16xf32>
    %c0_14 = arith.constant 0 : index
    %c0_15 = arith.constant 0 : index
    %20 = vector.load %arg3[%c0_14, %c0_15] : memref<1x16xf32, #tpu.memory_space<vmem>>, vector<1x16xf32>
    %21 = vector.broadcast %20 : vector<1x16xf32> to vector<48x16xf32>
    %22 = arith.addf %19, %21 : vector<48x16xf32>
    %cst_16 = arith.constant 0.000000e+00 : f32
    %23 = vector.broadcast %cst_16 : f32 to vector<48x16xf32>
    %24 = arith.maximumf %22, %23 : vector<48x16xf32>
    %c0_17 = arith.constant 0 : index
    %c0_18 = arith.constant 0 : index
    %25 = vector.load %arg12[%c0_17, %c0_18] : memref<3x48xf32, #tpu.memory_space<vmem>>, vector<3x48xf32>
    %c0_19 = arith.constant 0 : index
    %c0_20 = arith.constant 0 : index
    %26 = vector.load %arg13[%c0_19, %c0_20] : memref<48x3xf32, #tpu.memory_space<vmem>>, vector<48x3xf32>
    %cst_21 = arith.constant dense<0.000000e+00> : vector<3x16xf32>
    %27 = tpu.matmul %25, %24, %cst_21 {dimension_numbers = #tpu.dot_dimension_numbers<[1], [0], [0], [1], [0, 0, 1, 1], [], []>} : vector<3x48xf32>, vector<48x16xf32>, vector<3x16xf32> -> vector<3x16xf32>
    %28 = arith.mulf %24, %24 : vector<48x16xf32>
    %cst_22 = arith.constant dense<0.000000e+00> : vector<3x16xf32>
    %29 = tpu.matmul %25, %28, %cst_22 {dimension_numbers = #tpu.dot_dimension_numbers<[1], [0], [0], [1], [0, 0, 1, 1], [], []>} : vector<3x48xf32>, vector<48x16xf32>, vector<3x16xf32> -> vector<3x16xf32>
    %30 = arith.mulf %27, %27 : vector<3x16xf32>
    %31 = arith.subf %29, %30 : vector<3x16xf32>
    %cst_23 = arith.constant 9.99999974E-6 : f32
    %32 = vector.broadcast %cst_23 : f32 to vector<3x16xf32>
    %33 = arith.addf %31, %32 : vector<3x16xf32>
    %34 = math.rsqrt %33 : vector<3x16xf32>
    %cst_24 = arith.constant dense<0.000000e+00> : vector<48x16xf32>
    %35 = tpu.matmul %26, %27, %cst_24 {dimension_numbers = #tpu.dot_dimension_numbers<[1], [0], [0], [1], [0, 0, 1, 1], [], []>} : vector<48x3xf32>, vector<3x16xf32>, vector<48x16xf32> -> vector<48x16xf32>
    %cst_25 = arith.constant dense<0.000000e+00> : vector<48x16xf32>
    %36 = tpu.matmul %26, %34, %cst_25 {dimension_numbers = #tpu.dot_dimension_numbers<[1], [0], [0], [1], [0, 0, 1, 1], [], []>} : vector<48x3xf32>, vector<3x16xf32>, vector<48x16xf32> -> vector<48x16xf32>
    %37 = arith.subf %24, %35 : vector<48x16xf32>
    %38 = arith.mulf %37, %36 : vector<48x16xf32>
    %c0_26 = arith.constant 0 : index
    %c0_27 = arith.constant 0 : index
    %39 = vector.load %arg4[%c0_26, %c0_27] : memref<48x1xf32, #tpu.memory_space<vmem>>, vector<48x1xf32>
    %40 = vector.broadcast %39 : vector<48x1xf32> to vector<48x16xf32>
    %41 = arith.mulf %38, %40 : vector<48x16xf32>
    %c0_28 = arith.constant 0 : index
    %c0_29 = arith.constant 0 : index
    %42 = vector.load %arg5[%c0_28, %c0_29] : memref<48x1xf32, #tpu.memory_space<vmem>>, vector<48x1xf32>
    %43 = vector.broadcast %42 : vector<48x1xf32> to vector<48x16xf32>
    %44 = arith.addf %41, %43 : vector<48x16xf32>
    %c1_i32_30 = arith.constant 1 : i32
    %45 = tpu.dynamic_rotate %44 by %c1_i32_30 dim 0 : vector<48x16xf32>, i32 -> vector<48x16xf32>
    %46 = vector.broadcast %1 : vector<48x1xf32> to vector<48x16xf32>
    %47 = arith.mulf %45, %46 : vector<48x16xf32>
    %c47_i32_31 = arith.constant 47 : i32
    %48 = tpu.dynamic_rotate %44 by %c47_i32_31 dim 0 : vector<48x16xf32>, i32 -> vector<48x16xf32>
    %49 = vector.broadcast %2 : vector<48x1xf32> to vector<48x16xf32>
    %50 = arith.mulf %48, %49 : vector<48x16xf32>
    %c0_32 = arith.constant 0 : index
    %c0_33 = arith.constant 0 : index
    %c0_34 = arith.constant 0 : index
    %51 = vector.load %arg6[%c0_32, %c0_33, %c0_34] : memref<3x16x16xf32, #tpu.memory_space<vmem>>, vector<1x16x16xf32>
    %52 = vector.shape_cast %51 : vector<1x16x16xf32> to vector<16x16xf32>
    %cst_35 = arith.constant dense<0.000000e+00> : vector<48x16xf32>
    %53 = tpu.matmul %47, %52, %cst_35 {dimension_numbers = #tpu.dot_dimension_numbers<[1], [0], [0], [1], [0, 0, 1, 1], [], []>} : vector<48x16xf32>, vector<16x16xf32>, vector<48x16xf32> -> vector<48x16xf32>
    %c1_36 = arith.constant 1 : index
    %c0_37 = arith.constant 0 : index
    %c0_38 = arith.constant 0 : index
    %54 = vector.load %arg6[%c1_36, %c0_37, %c0_38] : memref<3x16x16xf32, #tpu.memory_space<vmem>>, vector<1x16x16xf32>
    %55 = vector.shape_cast %54 : vector<1x16x16xf32> to vector<16x16xf32>
    %cst_39 = arith.constant dense<0.000000e+00> : vector<48x16xf32>
    %56 = tpu.matmul %44, %55, %cst_39 {dimension_numbers = #tpu.dot_dimension_numbers<[1], [0], [0], [1], [0, 0, 1, 1], [], []>} : vector<48x16xf32>, vector<16x16xf32>, vector<48x16xf32> -> vector<48x16xf32>
    %57 = arith.addf %53, %56 : vector<48x16xf32>
    %c2_40 = arith.constant 2 : index
    %c0_41 = arith.constant 0 : index
    %c0_42 = arith.constant 0 : index
    %58 = vector.load %arg6[%c2_40, %c0_41, %c0_42] : memref<3x16x16xf32, #tpu.memory_space<vmem>>, vector<1x16x16xf32>
    %59 = vector.shape_cast %58 : vector<1x16x16xf32> to vector<16x16xf32>
    %cst_43 = arith.constant dense<0.000000e+00> : vector<48x16xf32>
    %60 = tpu.matmul %50, %59, %cst_43 {dimension_numbers = #tpu.dot_dimension_numbers<[1], [0], [0], [1], [0, 0, 1, 1], [], []>} : vector<48x16xf32>, vector<16x16xf32>, vector<48x16xf32> -> vector<48x16xf32>
    %61 = arith.addf %57, %60 : vector<48x16xf32>
    %c0_44 = arith.constant 0 : index
    %c0_45 = arith.constant 0 : index
    %62 = vector.load %arg7[%c0_44, %c0_45] : memref<1x16xf32, #tpu.memory_space<vmem>>, vector<1x16xf32>
    %63 = vector.broadcast %62 : vector<1x16xf32> to vector<48x16xf32>
    %64 = arith.addf %61, %63 : vector<48x16xf32>
    %cst_46 = arith.constant 0.000000e+00 : f32
    %65 = vector.broadcast %cst_46 : f32 to vector<48x16xf32>
    %66 = arith.maximumf %64, %65 : vector<48x16xf32>
    %c0_47 = arith.constant 0 : index
    %c0_48 = arith.constant 0 : index
    %67 = vector.load %arg12[%c0_47, %c0_48] : memref<3x48xf32, #tpu.memory_space<vmem>>, vector<3x48xf32>
    %c0_49 = arith.constant 0 : index
    %c0_50 = arith.constant 0 : index
    %68 = vector.load %arg13[%c0_49, %c0_50] : memref<48x3xf32, #tpu.memory_space<vmem>>, vector<48x3xf32>
    %cst_51 = arith.constant dense<0.000000e+00> : vector<3x16xf32>
    %69 = tpu.matmul %67, %66, %cst_51 {dimension_numbers = #tpu.dot_dimension_numbers<[1], [0], [0], [1], [0, 0, 1, 1], [], []>} : vector<3x48xf32>, vector<48x16xf32>, vector<3x16xf32> -> vector<3x16xf32>
    %70 = arith.mulf %66, %66 : vector<48x16xf32>
    %cst_52 = arith.constant dense<0.000000e+00> : vector<3x16xf32>
    %71 = tpu.matmul %67, %70, %cst_52 {dimension_numbers = #tpu.dot_dimension_numbers<[1], [0], [0], [1], [0, 0, 1, 1], [], []>} : vector<3x48xf32>, vector<48x16xf32>, vector<3x16xf32> -> vector<3x16xf32>
    %72 = arith.mulf %69, %69 : vector<3x16xf32>
    %73 = arith.subf %71, %72 : vector<3x16xf32>
    %cst_53 = arith.constant 9.99999974E-6 : f32
    %74 = vector.broadcast %cst_53 : f32 to vector<3x16xf32>
    %75 = arith.addf %73, %74 : vector<3x16xf32>
    %76 = math.rsqrt %75 : vector<3x16xf32>
    %cst_54 = arith.constant dense<0.000000e+00> : vector<48x16xf32>
    %77 = tpu.matmul %68, %69, %cst_54 {dimension_numbers = #tpu.dot_dimension_numbers<[1], [0], [0], [1], [0, 0, 1, 1], [], []>} : vector<48x3xf32>, vector<3x16xf32>, vector<48x16xf32> -> vector<48x16xf32>
    %cst_55 = arith.constant dense<0.000000e+00> : vector<48x16xf32>
    %78 = tpu.matmul %68, %76, %cst_55 {dimension_numbers = #tpu.dot_dimension_numbers<[1], [0], [0], [1], [0, 0, 1, 1], [], []>} : vector<48x3xf32>, vector<3x16xf32>, vector<48x16xf32> -> vector<48x16xf32>
    %79 = arith.subf %66, %77 : vector<48x16xf32>
    %80 = arith.mulf %79, %78 : vector<48x16xf32>
    %c0_56 = arith.constant 0 : index
    %c0_57 = arith.constant 0 : index
    %81 = vector.load %arg8[%c0_56, %c0_57] : memref<48x1xf32, #tpu.memory_space<vmem>>, vector<48x1xf32>
    %82 = vector.broadcast %81 : vector<48x1xf32> to vector<48x16xf32>
    %83 = arith.mulf %80, %82 : vector<48x16xf32>
    %c0_58 = arith.constant 0 : index
    %c0_59 = arith.constant 0 : index
    %84 = vector.load %arg9[%c0_58, %c0_59] : memref<48x1xf32, #tpu.memory_space<vmem>>, vector<48x1xf32>
    %85 = vector.broadcast %84 : vector<48x1xf32> to vector<48x16xf32>
    %86 = arith.addf %83, %85 : vector<48x16xf32>
    %c0_60 = arith.constant 0 : index
    %c0_61 = arith.constant 0 : index
    %87 = vector.load %arg14[%c0_60, %c0_61] : memref<3x48xf32, #tpu.memory_space<vmem>>, vector<3x48xf32>
    %cst_62 = arith.constant dense<0.000000e+00> : vector<3x16xf32>
    %88 = tpu.matmul %87, %86, %cst_62 {dimension_numbers = #tpu.dot_dimension_numbers<[1], [0], [0], [1], [0, 0, 1, 1], [], []>} : vector<3x48xf32>, vector<48x16xf32>, vector<3x16xf32> -> vector<3x16xf32>
    %c0_63 = arith.constant 0 : index
    %c0_64 = arith.constant 0 : index
    %89 = memref.load %arg15[%c0_63, %c0_64] : memref<1x1xf32, #tpu.memory_space<smem>>
    %90 = vector.broadcast %89 : f32 to vector<3x16xf32>
    %91 = arith.addf %88, %90 : vector<3x16xf32>
    %c0_65 = arith.constant 0 : index
    %c0_66 = arith.constant 0 : index
    %c0_67 = arith.constant 0 : index
    %92 = vector.load %arg16[%c0_65, %c0_66, %c0_67] : memref<1x3x16xf32, #tpu.memory_space<vmem>>, vector<1x3x16xf32>
    %93 = vector.shape_cast %92 : vector<1x3x16xf32> to vector<3x16xf32>
    %94 = vector.shape_cast %91 : vector<3x16xf32> to vector<1x3x16xf32>
    tpu.vector_store %arg16[%c0_65, %c0_66, %c0_67], %94 {strides = array<i32>} : memref<1x3x16xf32, #tpu.memory_space<vmem>>, vector<1x3x16xf32>,
    return
  }
  func.func @transform_0(%arg0: i32) -> (i32, i32) {
    %c0_i32 = arith.constant 0 : i32
    %c0_i32_0 = arith.constant 0 : i32
    return %arg0, %c0_i32 : i32, i32
  }
  func.func @transform_1(%arg0: i32) -> (i32, i32, i32) {
    %c0_i32 = arith.constant 0 : i32
    %c0_i32_0 = arith.constant 0 : i32
    %c0_i32_1 = arith.constant 0 : i32
    %c0_i32_2 = arith.constant 0 : i32
    return %c0_i32, %c0_i32_0, %c0_i32_1 : i32, i32, i32
  }
  func.func @transform_2(%arg0: i32) -> (i32, i32) {
    %c0_i32 = arith.constant 0 : i32
    %c0_i32_0 = arith.constant 0 : i32
    %c0_i32_1 = arith.constant 0 : i32
    return %c0_i32, %c0_i32_0 : i32, i32
  }
  func.func @transform_3(%arg0: i32) -> (i32, i32) {
    %c0_i32 = arith.constant 0 : i32
    %c0_i32_0 = arith.constant 0 : i32
    %c0_i32_1 = arith.constant 0 : i32
    return %c0_i32, %c0_i32_0 : i32, i32
  }
  func.func @transform_4(%arg0: i32) -> (i32, i32) {
    %c0_i32 = arith.constant 0 : i32
    %c0_i32_0 = arith.constant 0 : i32
    %c0_i32_1 = arith.constant 0 : i32
    return %c0_i32, %c0_i32_0 : i32, i32
  }
  func.func @transform_5(%arg0: i32) -> (i32, i32, i32) {
    %c0_i32 = arith.constant 0 : i32
    %c0_i32_0 = arith.constant 0 : i32
    %c0_i32_1 = arith.constant 0 : i32
    %c0_i32_2 = arith.constant 0 : i32
    return %c0_i32, %c0_i32_0, %c0_i32_1 : i32, i32, i32
  }
  func.func @transform_6(%arg0: i32) -> (i32, i32) {
    %c0_i32 = arith.constant 0 : i32
    %c0_i32_0 = arith.constant 0 : i32
    %c0_i32_1 = arith.constant 0 : i32
    return %c0_i32, %c0_i32_0 : i32, i32
  }
  func.func @transform_7(%arg0: i32) -> (i32, i32) {
    %c0_i32 = arith.constant 0 : i32
    %c0_i32_0 = arith.constant 0 : i32
    %c0_i32_1 = arith.constant 0 : i32
    return %c0_i32, %c0_i32_0 : i32, i32
  }
  func.func @transform_8(%arg0: i32) -> (i32, i32) {
    %c0_i32 = arith.constant 0 : i32
    %c0_i32_0 = arith.constant 0 : i32
    %c0_i32_1 = arith.constant 0 : i32
    return %c0_i32, %c0_i32_0 : i32, i32
  }
  func.func @transform_9(%arg0: i32) -> (i32, i32) {
    %c0_i32 = arith.constant 0 : i32
    %c0_i32_0 = arith.constant 0 : i32
    %c0_i32_1 = arith.constant 0 : i32
    return %c0_i32, %c0_i32_0 : i32, i32
  }
  func.func @transform_10(%arg0: i32) -> (i32, i32) {
    %c0_i32 = arith.constant 0 : i32
    %c0_i32_0 = arith.constant 0 : i32
    %c0_i32_1 = arith.constant 0 : i32
    return %c0_i32, %c0_i32_0 : i32, i32
  }
  func.func @transform_11(%arg0: i32) -> (i32, i32) {
    %c0_i32 = arith.constant 0 : i32
    %c0_i32_0 = arith.constant 0 : i32
    %c0_i32_1 = arith.constant 0 : i32
    return %c0_i32, %c0_i32_0 : i32, i32
  }
  func.func @transform_12(%arg0: i32) -> (i32, i32) {
    %c0_i32 = arith.constant 0 : i32
    %c0_i32_0 = arith.constant 0 : i32
    %c0_i32_1 = arith.constant 0 : i32
    return %c0_i32, %c0_i32_0 : i32, i32
  }
  func.func @transform_13(%arg0: i32) -> (i32, i32) {
    %c0_i32 = arith.constant 0 : i32
    %c0_i32_0 = arith.constant 0 : i32
    %c0_i32_1 = arith.constant 0 : i32
    return %c0_i32, %c0_i32_0 : i32, i32
  }
  func.func @transform_14(%arg0: i32) -> (i32, i32) {
    %c0_i32 = arith.constant 0 : i32
    %c0_i32_0 = arith.constant 0 : i32
    %c0_i32_1 = arith.constant 0 : i32
    return %c0_i32, %c0_i32_0 : i32, i32
  }
  func.func @transform_15(%arg0: i32) -> (i32, i32, i32) {
    %c0_i32 = arith.constant 0 : i32
    %c0_i32_0 = arith.constant 0 : i32
    %c0_i32_1 = arith.constant 0 : i32
    return %arg0, %c0_i32, %c0_i32_0 : i32, i32, i32
  }
}

</mosaic_0001>

<llo_original>
// kernel: tpu_custom_call.1
$region0: #{tpu_custom_call.1}
  #allocation0 [shape = 'u32[]', space=smem, size = 0x4, offset = 0x4, fixed_abs, tag = 'smem constant byte address 0x4 - core index']
  #allocation1 [shape = 'u32[72,128]{1,0:T(1,128)}', space=vmem, size = 0x9000, scoped, tag = 'internal scratch']
  #allocation2 [shape = 'f32[1,1]{1,0:T(1,128)S(6)}', space=smem, size = 0x200, scoped, tag = 'scoped memory for tpu_custom_call.1']
  %s0 = inlined_call_operand.vmem [shape: f32[96,16], index: 0, kind: input, shape index: {}]
  %s1 = inlined_call_operand.vmem [shape: f32[3,16,16], index: 1, kind: input, shape index: {}]
  %s2 = inlined_call_operand.vmem [shape: f32[1,16], index: 2, kind: input, shape index: {}]
  %s3 = inlined_call_operand.vmem [shape: f32[48,1], index: 3, kind: input, shape index: {}]
  %s4 = inlined_call_operand.vmem [shape: f32[48,1], index: 4, kind: input, shape index: {}]
  %s5 = inlined_call_operand.vmem [shape: f32[3,16,16], index: 5, kind: input, shape index: {}]
  %s6 = inlined_call_operand.vmem [shape: f32[1,16], index: 6, kind: input, shape index: {}]
  %s7 = inlined_call_operand.vmem [shape: f32[48,1], index: 7, kind: input, shape index: {}]
  %s8 = inlined_call_operand.vmem [shape: f32[48,1], index: 8, kind: input, shape index: {}]
  %s9 = inlined_call_operand.vmem [shape: f32[48,1], index: 9, kind: input, shape index: {}]
  %s10 = inlined_call_operand.vmem [shape: f32[48,1], index: 10, kind: input, shape index: {}]
  %s11 = inlined_call_operand.vmem [shape: f32[3,48], index: 11, kind: input, shape index: {}]
  %s12 = inlined_call_operand.vmem [shape: f32[48,3], index: 12, kind: input, shape index: {}]
  %s13 = inlined_call_operand.vmem [shape: f32[3,48], index: 13, kind: input, shape index: {}]
  %s14 = inlined_call_operand.<no memory space> [shape: f32[1,1], index: 14, kind: input, shape index: {}]
  %s15 = inlined_call_operand.vmem [shape: f32[2,3,16], index: 15, kind: output, shape index: {}]
  %s16 = sld [smem:[#allocation0]]
  $region93: #{tpu_custom_call.1} parent=0
    _
  %s18 = ssub.s32 1, %s16
  %s19 = scalar_select 0, %s18, %s16
  %20 = sst [smem:[#allocation2]] %s14
  loop: start=0, step=1, limit=4
  $region2: #{tpu_custom_call.1} parent=0 // loop_pre_header
    _
  $region3: #{tpu_custom_call.1} parent=0 // loop_header
    %s22 = sphi 0, %s26
    %p23 = scmp.ge.s32.totalorder %s22, 4
    %s32 = sphi 0, %s34
    %s35 = sphi 0, %s32
    %s36 = sphi 0, %s35
    %s52 = sphi 0, %s36
    %s56 = sphi 0, %s56
    %s58 = sphi 0, %s56
    %s59 = sphi 0, %s58
    %s73 = sphi 0, %s59
    %s77 = sphi 0, %s77
    %s79 = sphi 0, %s77
    %s80 = sphi 0, %s79
    %s94 = sphi 0, %s80
    %s98 = sphi 0, %s98
    %s100 = sphi 0, %s98
    %s101 = sphi 0, %s100
    %s115 = sphi 0, %s101
    %s119 = sphi 0, %s119
    %s121 = sphi 0, %s119
    %s122 = sphi 0, %s121
    %s136 = sphi 0, %s122
    %s140 = sphi 0, %s140
    %s142 = sphi 0, %s140
    %s143 = sphi 0, %s142
    %s157 = sphi 0, %s143
    %s161 = sphi 0, %s161
    %s163 = sphi 0, %s161
    %s164 = sphi 0, %s163
    %s178 = sphi 0, %s164
    %s182 = sphi 0, %s182
    %s184 = sphi 0, %s182
    %s185 = sphi 0, %s184
    %s199 = sphi 0, %s185
    %s203 = sphi 0, %s203
    %s205 = sphi 0, %s203
    %s206 = sphi 0, %s205
    %s220 = sphi 0, %s206
    %s224 = sphi 0, %s224
    %s226 = sphi 0, %s224
    %s227 = sphi 0, %s226
    %s241 = sphi 0, %s227
    %s245 = sphi 0, %s245
    %s247 = sphi 0, %s245
    %s248 = sphi 0, %s247
    %s262 = sphi 0, %s248
    %s266 = sphi 0, %s266
    %s268 = sphi 0, %s266
    %s269 = sphi 0, %s268
    %s283 = sphi 0, %s269
    %s287 = sphi 0, %s287
    %s289 = sphi 0, %s287
    %s290 = sphi 0, %s289
    %s304 = sphi 0, %s290
    %s308 = sphi 0, %s308
    %s310 = sphi 0, %s308
    %s311 = sphi 0, %s310
    %s325 = sphi 0, %s311
    %s329 = sphi 0, %s329
    %s331 = sphi 0, %s329
    %s332 = sphi 0, %s331
    %s346 = sphi 0, %s332
    %s352 = sphi 0, %s354
    %s355 = sphi 0, %s352
    %s356 = sphi 0, %s355
    %s372 = sphi 0, %s356
  $region4: #{tpu_custom_call.1} parent=0 // loop_header_branch
    %25 = sbr.rel (%p23) target = $region8
  $region5: #{tpu_custom_call.1} parent=0 // loop_body
    %s27 = ssub.s32 %s22, 1
    %s28 = ssub.s32 %s22, 2
    %s29 = sadd.s32 %s22, 1
    %s30 = ssub.s32 %s22, %s29
    %p31 = scmp.eq.s32.totalorder %s30, 0
    %s33 = sadd.s32 %s32, 1
    %s34 = scalar_select %p31, %s32, %s33
    %p37 = pneg %p31
    %p38 = scmp.eq.s32.totalorder %s22, 1
    %p39 = por %p37, %p38
    %p40 = scmp.ne.s32.totalorder %s32, %s35
    %p41 = scmp.eq.s32.totalorder %s22, 0
    %p42 = por %p40, %p41
    %p43 = scmp.ne.s32.totalorder %s32, %s35
    %p44 = scmp.eq.s32.totalorder %s27, 1
    %p45 = por %p43, %p44
    %p46 = scmp.ne.s32.totalorder %s35, %s36
    %p47 = scmp.eq.s32.totalorder %s27, 0
    %p48 = por %p46, %p47
    %p49 = scmp.ne.s32.totalorder %s35, %s36
    %p50 = scmp.eq.s32.totalorder %s28, 1
    %p51 = por %p49, %p50
    %p53 = scmp.ne.s32.totalorder %s36, %s52
    %p54 = scmp.eq.s32.totalorder %s28, 0
    %p55 = por %p53, %p54
    %s57 = sadd.s32 %s56, 1
    %p60 = scmp.eq.s32.totalorder %s22, 1
    %p61 = scmp.ne.s32.totalorder %s56, %s58
    %p62 = scmp.eq.s32.totalorder %s22, 0
    %p63 = por %p61, %p62
    %p64 = scmp.ne.s32.totalorder %s56, %s58
    %p65 = scmp.eq.s32.totalorder %s27, 1
    %p66 = por %p64, %p65
    %p67 = scmp.ne.s32.totalorder %s58, %s59
    %p68 = scmp.eq.s32.totalorder %s27, 0
    %p69 = por %p67, %p68
    %p70 = scmp.ne.s32.totalorder %s58, %s59
    %p71 = scmp.eq.s32.totalorder %s28, 1
    %p72 = por %p70, %p71
    %p74 = scmp.ne.s32.totalorder %s59, %s73
    %p75 = scmp.eq.s32.totalorder %s28, 0
    %p76 = por %p74, %p75
    %s78 = sadd.s32 %s77, 1
    %p81 = scmp.eq.s32.totalorder %s22, 1
    %p82 = scmp.ne.s32.totalorder %s77, %s79
    %p83 = scmp.eq.s32.totalorder %s22, 0
    %p84 = por %p82, %p83
    %p85 = scmp.ne.s32.totalorder %s77, %s79
    %p86 = scmp.eq.s32.totalorder %s27, 1
    %p87 = por %p85, %p86
    %p88 = scmp.ne.s32.totalorder %s79, %s80
    %p89 = scmp.eq.s32.totalorder %s27, 0
    %p90 = por %p88, %p89
    %p91 = scmp.ne.s32.totalorder %s79, %s80
    %p92 = scmp.eq.s32.totalorder %s28, 1
    %p93 = por %p91, %p92
    %p95 = scmp.ne.s32.totalorder %s80, %s94
    %p96 = scmp.eq.s32.totalorder %s28, 0
    %p97 = por %p95, %p96
    %s99 = sadd.s32 %s98, 1
    %p102 = scmp.eq.s32.totalorder %s22, 1
    %p103 = scmp.ne.s32.totalorder %s98, %s100
    %p104 = scmp.eq.s32.totalorder %s22, 0
    %p105 = por %p103, %p104
    %p106 = scmp.ne.s32.totalorder %s98, %s100
    %p107 = scmp.eq.s32.totalorder %s27, 1
    %p108 = por %p106, %p107
    %p109 = scmp.ne.s32.totalorder %s100, %s101
    %p110 = scmp.eq.s32.totalorder %s27, 0
    %p111 = por %p109, %p110
    %p112 = scmp.ne.s32.totalorder %s100, %s101
    %p113 = scmp.eq.s32.totalorder %s28, 1
    %p114 = por %p112, %p113
    %p116 = scmp.ne.s32.totalorder %s101, %s115
    %p117 = scmp.eq.s32.totalorder %s28, 0
    %p118 = por %p116, %p117
    %s120 = sadd.s32 %s119, 1
    %p123 = scmp.eq.s32.totalorder %s22, 1
    %p124 = scmp.ne.s32.totalorder %s119, %s121
    %p125 = scmp.eq.s32.totalorder %s22, 0
    %p126 = por %p124, %p125
    %p127 = scmp.ne.s32.totalorder %s119, %s121
    %p128 = scmp.eq.s32.totalorder %s27, 1
    %p129 = por %p127, %p128
    %p130 = scmp.ne.s32.totalorder %s121, %s122
    %p131 = scmp.eq.s32.totalorder %s27, 0
    %p132 = por %p130, %p131
    %p133 = scmp.ne.s32.totalorder %s121, %s122
    %p134 = scmp.eq.s32.totalorder %s28, 1
    %p135 = por %p133, %p134
    %p137 = scmp.ne.s32.totalorder %s122, %s136
    %p138 = scmp.eq.s32.totalorder %s28, 0
    %p139 = por %p137, %p138
    %s141 = sadd.s32 %s140, 1
    %p144 = scmp.eq.s32.totalorder %s22, 1
    %p145 = scmp.ne.s32.totalorder %s140, %s142
    %p146 = scmp.eq.s32.totalorder %s22, 0
    %p147 = por %p145, %p146
    %p148 = scmp.ne.s32.totalorder %s140, %s142
    %p149 = scmp.eq.s32.totalorder %s27, 1
    %p150 = por %p148, %p149
    %p151 = scmp.ne.s32.totalorder %s142, %s143
    %p152 = scmp.eq.s32.totalorder %s27, 0
    %p153 = por %p151, %p152
    %p154 = scmp.ne.s32.totalorder %s142, %s143
    %p155 = scmp.eq.s32.totalorder %s28, 1
    %p156 = por %p154, %p155
    %p158 = scmp.ne.s32.totalorder %s143, %s157
    %p159 = scmp.eq.s32.totalorder %s28, 0
    %p160 = por %p158, %p159
    %s162 = sadd.s32 %s161, 1
    %p165 = scmp.eq.s32.totalorder %s22, 1
    %p166 = scmp.ne.s32.totalorder %s161, %s163
    %p167 = scmp.eq.s32.totalorder %s22, 0
    %p168 = por %p166, %p167
    %p169 = scmp.ne.s32.totalorder %s161, %s163
    %p170 = scmp.eq.s32.totalorder %s27, 1
    %p171 = por %p169, %p170
    %p172 = scmp.ne.s32.totalorder %s163, %s164
    %p173 = scmp.eq.s32.totalorder %s27, 0
    %p174 = por %p172, %p173
    %p175 = scmp.ne.s32.totalorder %s163, %s164
    %p176 = scmp.eq.s32.totalorder %s28, 1
    %p177 = por %p175, %p176
    %p179 = scmp.ne.s32.totalorder %s164, %s178
    %p180 = scmp.eq.s32.totalorder %s28, 0
    %p181 = por %p179, %p180
    %s183 = sadd.s32 %s182, 1
    %p186 = scmp.eq.s32.totalorder %s22, 1
    %p187 = scmp.ne.s32.totalorder %s182, %s184
    %p188 = scmp.eq.s32.totalorder %s22, 0
    %p189 = por %p187, %p188
    %p190 = scmp.ne.s32.totalorder %s182, %s184
    %p191 = scmp.eq.s32.totalorder %s27, 1
    %p192 = por %p190, %p191
    %p193 = scmp.ne.s32.totalorder %s184, %s185
    %p194 = scmp.eq.s32.totalorder %s27, 0
    %p195 = por %p193, %p194
    %p196 = scmp.ne.s32.totalorder %s184, %s185
    %p197 = scmp.eq.s32.totalorder %s28, 1
    %p198 = por %p196, %p197
    %p200 = scmp.ne.s32.totalorder %s185, %s199
    %p201 = scmp.eq.s32.totalorder %s28, 0
    %p202 = por %p200, %p201
    %s204 = sadd.s32 %s203, 1
    %p207 = scmp.eq.s32.totalorder %s22, 1
    %p208 = scmp.ne.s32.totalorder %s203, %s205
    %p209 = scmp.eq.s32.totalorder %s22, 0
    %p210 = por %p208, %p209
    %p211 = scmp.ne.s32.totalorder %s203, %s205
    %p212 = scmp.eq.s32.totalorder %s27, 1
    %p213 = por %p211, %p212
    %p214 = scmp.ne.s32.totalorder %s205, %s206
    %p215 = scmp.eq.s32.totalorder %s27, 0
    %p216 = por %p214, %p215
    %p217 = scmp.ne.s32.totalorder %s205, %s206
    %p218 = scmp.eq.s32.totalorder %s28, 1
    %p219 = por %p217, %p218
    %p221 = scmp.ne.s32.totalorder %s206, %s220
    %p222 = scmp.eq.s32.totalorder %s28, 0
    %p223 = por %p221, %p222
    %s225 = sadd.s32 %s224, 1
    %p228 = scmp.eq.s32.totalorder %s22, 1
    %p229 = scmp.ne.s32.totalorder %s224, %s226
    %p230 = scmp.eq.s32.totalorder %s22, 0
    %p231 = por %p229, %p230
    %p232 = scmp.ne.s32.totalorder %s224, %s226
    %p233 = scmp.eq.s32.totalorder %s27, 1
    %p234 = por %p232, %p233
    %p235 = scmp.ne.s32.totalorder %s226, %s227
    %p236 = scmp.eq.s32.totalorder %s27, 0
    %p237 = por %p235, %p236
    %p238 = scmp.ne.s32.totalorder %s226, %s227
    %p239 = scmp.eq.s32.totalorder %s28, 1
    %p240 = por %p238, %p239
    %p242 = scmp.ne.s32.totalorder %s227, %s241
    %p243 = scmp.eq.s32.totalorder %s28, 0
    %p244 = por %p242, %p243
    %s246 = sadd.s32 %s245, 1
    %p249 = scmp.eq.s32.totalorder %s22, 1
    %p250 = scmp.ne.s32.totalorder %s245, %s247
    %p251 = scmp.eq.s32.totalorder %s22, 0
    %p252 = por %p250, %p251
    %p253 = scmp.ne.s32.totalorder %s245, %s247
    %p254 = scmp.eq.s32.totalorder %s27, 1
    %p255 = por %p253, %p254
    %p256 = scmp.ne.s32.totalorder %s247, %s248
    %p257 = scmp.eq.s32.totalorder %s27, 0
    %p258 = por %p256, %p257
    %p259 = scmp.ne.s32.totalorder %s247, %s248
    %p260 = scmp.eq.s32.totalorder %s28, 1
    %p261 = por %p259, %p260
    %p263 = scmp.ne.s32.totalorder %s248, %s262
    %p264 = scmp.eq.s32.totalorder %s28, 0
    %p265 = por %p263, %p264
    %s267 = sadd.s32 %s266, 1
    %p270 = scmp.eq.s32.totalorder %s22, 1
    %p271 = scmp.ne.s32.totalorder %s266, %s268
    %p272 = scmp.eq.s32.totalorder %s22, 0
    %p273 = por %p271, %p272
    %p274 = scmp.ne.s32.totalorder %s266, %s268
    %p275 = scmp.eq.s32.totalorder %s27, 1
    %p276 = por %p274, %p275
    %p277 = scmp.ne.s32.totalorder %s268, %s269
    %p278 = scmp.eq.s32.totalorder %s27, 0
    %p279 = por %p277, %p278
    %p280 = scmp.ne.s32.totalorder %s268, %s269
    %p281 = scmp.eq.s32.totalorder %s28, 1
    %p282 = por %p280, %p281
    %p284 = scmp.ne.s32.totalorder %s269, %s283
    %p285 = scmp.eq.s32.totalorder %s28, 0
    %p286 = por %p284, %p285
    %s288 = sadd.s32 %s287, 1
    %p291 = scmp.eq.s32.totalorder %s22, 1
    %p292 = scmp.ne.s32.totalorder %s287, %s289
    %p293 = scmp.eq.s32.totalorder %s22, 0
    %p294 = por %p292, %p293
    %p295 = scmp.ne.s32.totalorder %s287, %s289
    %p296 = scmp.eq.s32.totalorder %s27, 1
    %p297 = por %p295, %p296
    %p298 = scmp.ne.s32.totalorder %s289, %s290
    %p299 = scmp.eq.s32.totalorder %s27, 0
    %p300 = por %p298, %p299
    %p301 = scmp.ne.s32.totalorder %s289, %s290
    %p302 = scmp.eq.s32.totalorder %s28, 1
    %p303 = por %p301, %p302
    %p305 = scmp.ne.s32.totalorder %s290, %s304
    %p306 = scmp.eq.s32.totalorder %s28, 0
    %p307 = por %p305, %p306
    %s309 = sadd.s32 %s308, 1
    %p312 = scmp.eq.s32.totalorder %s22, 1
    %p313 = scmp.ne.s32.totalorder %s308, %s310
    %p314 = scmp.eq.s32.totalorder %s22, 0
    %p315 = por %p313, %p314
    %p316 = scmp.ne.s32.totalorder %s308, %s310
    %p317 = scmp.eq.s32.totalorder %s27, 1
    %p318 = por %p316, %p317
    %p319 = scmp.ne.s32.totalorder %s310, %s311
    %p320 = scmp.eq.s32.totalorder %s27, 0
    %p321 = por %p319, %p320
    %p322 = scmp.ne.s32.totalorder %s310, %s311
    %p323 = scmp.eq.s32.totalorder %s28, 1
    %p324 = por %p322, %p323
    %p326 = scmp.ne.s32.totalorder %s311, %s325
    %p327 = scmp.eq.s32.totalorder %s28, 0
    %p328 = por %p326, %p327
    %s330 = sadd.s32 %s329, 1
    %p333 = scmp.eq.s32.totalorder %s22, 1
    %p334 = scmp.ne.s32.totalorder %s329, %s331
    %p335 = scmp.eq.s32.totalorder %s22, 0
    %p336 = por %p334, %p335
    %p337 = scmp.ne.s32.totalorder %s329, %s331
    %p338 = scmp.eq.s32.totalorder %s27, 1
    %p339 = por %p337, %p338
    %p340 = scmp.ne.s32.totalorder %s331, %s332
    %p341 = scmp.eq.s32.totalorder %s27, 0
    %p342 = por %p340, %p341
    %p343 = scmp.ne.s32.totalorder %s331, %s332
    %p344 = scmp.eq.s32.totalorder %s28, 1
    %p345 = por %p343, %p344
    %p347 = scmp.ne.s32.totalorder %s332, %s346
    %p348 = scmp.eq.s32.totalorder %s28, 0
    %p349 = por %p347, %p348
    %s350 = ssub.s32 %s22, %s29
    %p351 = scmp.eq.s32.totalorder %s350, 0
    %s353 = sadd.s32 %s352, 1
    %s354 = scalar_select %p351, %s352, %s353
    %p357 = pneg %p351
    %p358 = scmp.eq.s32.totalorder %s22, 1
    %p359 = por %p357, %p358
    %p360 = scmp.ne.s32.totalorder %s352, %s355
    %p361 = scmp.eq.s32.totalorder %s22, 0
    %p362 = por %p360, %p361
    %p363 = scmp.ne.s32.totalorder %s352, %s355
    %p364 = scmp.eq.s32.totalorder %s27, 1
    %p365 = por %p363, %p364
    %p366 = scmp.ne.s32.totalorder %s355, %s356
    %p367 = scmp.eq.s32.totalorder %s27, 0
    %p368 = por %p366, %p367
    %p369 = scmp.ne.s32.totalorder %s355, %s356
    %p370 = scmp.eq.s32.totalorder %s28, 1
    %p371 = por %p369, %p370
    %p373 = scmp.ne.s32.totalorder %s356, %s372
    %p374 = scmp.eq.s32.totalorder %s28, 0
    %p375 = por %p373, %p374
    %p376 = scmp.le.s32.totalorder 1, %s22
    %p377 = scmp.lt.s32.totalorder %s22, 3
    %p378 = pnand %p376, %p377
    %p379 = pneg %p378
    // Predicated region
    $region9: #{tpu_custom_call.1} parent=5 // pred_check
      _
    $region10: #{tpu_custom_call.1} parent=5 // pred_check_branch
      %381 = sbr.rel (%p378) target = $region12
    $region11: #{tpu_custom_call.1} parent=5 // pred_region
      %s382 = ssub.s32 %s22, 1
      // Predicated region
      $region13: #{tpu_custom_call.1} parent=11 // pred_check
        %p383 = pneg %p69
      $region14: #{tpu_custom_call.1} parent=11 // pred_check_branch
        %385 = sbr.rel (%p383) target = $region16
      $region15: #{tpu_custom_call.1} parent=11 // pred_region
        _
      $region16: #{tpu_custom_call.1} parent=11 // pred_fallthru
        _
      // Predicated region
      $region17: #{tpu_custom_call.1} parent=11 // pred_check
        %p386 = pneg %p90
      $region18: #{tpu_custom_call.1} parent=11 // pred_check_branch
        %388 = sbr.rel (%p386) target = $region20
      $region19: #{tpu_custom_call.1} parent=11 // pred_region
        _
      $region20: #{tpu_custom_call.1} parent=11 // pred_fallthru
        _
      // Predicated region
      $region21: #{tpu_custom_call.1} parent=11 // pred_check
        %p389 = pneg %p111
      $region22: #{tpu_custom_call.1} parent=11 // pred_check_branch
        %391 = sbr.rel (%p389) target = $region24
      $region23: #{tpu_custom_call.1} parent=11 // pred_region
        _
      $region24: #{tpu_custom_call.1} parent=11 // pred_fallthru
        _
      // Predicated region
      $region25: #{tpu_custom_call.1} parent=11 // pred_check
        %p392 = pneg %p132
      $region26: #{tpu_custom_call.1} parent=11 // pred_check_branch
        %394 = sbr.rel (%p392) target = $region28
      $region27: #{tpu_custom_call.1} parent=11 // pred_region
        _
      $region28: #{tpu_custom_call.1} parent=11 // pred_fallthru
        _
      // Predicated region
      $region29: #{tpu_custom_call.1} parent=11 // pred_check
        %p395 = pneg %p153
      $region30: #{tpu_custom_call.1} parent=11 // pred_check_branch
        %397 = sbr.rel (%p395) target = $region32
      $region31: #{tpu_custom_call.1} parent=11 // pred_region
        _
      $region32: #{tpu_custom_call.1} parent=11 // pred_fallthru
        _
      // Predicated region
      $region33: #{tpu_custom_call.1} parent=11 // pred_check
        %p398 = pneg %p174
      $region34: #{tpu_custom_call.1} parent=11 // pred_check_branch
        %400 = sbr.rel (%p398) target = $region36
      $region35: #{tpu_custom_call.1} parent=11 // pred_region
        _
      $region36: #{tpu_custom_call.1} parent=11 // pred_fallthru
        _
      // Predicated region
      $region37: #{tpu_custom_call.1} parent=11 // pred_check
        %p401 = pneg %p195
      $region38: #{tpu_custom_call.1} parent=11 // pred_check_branch
        %403 = sbr.rel (%p401) target = $region40
      $region39: #{tpu_custom_call.1} parent=11 // pred_region
        _
      $region40: #{tpu_custom_call.1} parent=11 // pred_fallthru
        _
      // Predicated region
      $region41: #{tpu_custom_call.1} parent=11 // pred_check
        %p404 = pneg %p216
      $region42: #{tpu_custom_call.1} parent=11 // pred_check_branch
        %406 = sbr.rel (%p404) target = $region44
      $region43: #{tpu_custom_call.1} parent=11 // pred_region
        _
      $region44: #{tpu_custom_call.1} parent=11 // pred_fallthru
        _
      // Predicated region
      $region45: #{tpu_custom_call.1} parent=11 // pred_check
        %p407 = pneg %p237
      $region46: #{tpu_custom_call.1} parent=11 // pred_check_branch
        %409 = sbr.rel (%p407) target = $region48
      $region47: #{tpu_custom_call.1} parent=11 // pred_region
        _
      $region48: #{tpu_custom_call.1} parent=11 // pred_fallthru
        _
      // Predicated region
      $region49: #{tpu_custom_call.1} parent=11 // pred_check
        %p410 = pneg %p258
      $region50: #{tpu_custom_call.1} parent=11 // pred_check_branch
        %412 = sbr.rel (%p410) target = $region52
      $region51: #{tpu_custom_call.1} parent=11 // pred_region
        _
      $region52: #{tpu_custom_call.1} parent=11 // pred_fallthru
        _
      // Predicated region
      $region53: #{tpu_custom_call.1} parent=11 // pred_check
        %p413 = pneg %p279
      $region54: #{tpu_custom_call.1} parent=11 // pred_check_branch
        %415 = sbr.rel (%p413) target = $region56
      $region55: #{tpu_custom_call.1} parent=11 // pred_region
        _
      $region56: #{tpu_custom_call.1} parent=11 // pred_fallthru
        _
      // Predicated region
      $region57: #{tpu_custom_call.1} parent=11 // pred_check
        %p416 = pneg %p300
      $region58: #{tpu_custom_call.1} parent=11 // pred_check_branch
        %418 = sbr.rel (%p416) target = $region60
      $region59: #{tpu_custom_call.1} parent=11 // pred_region
        _
      $region60: #{tpu_custom_call.1} parent=11 // pred_fallthru
        _
      // Predicated region
      $region61: #{tpu_custom_call.1} parent=11 // pred_check
        %p419 = pneg %p321
      $region62: #{tpu_custom_call.1} parent=11 // pred_check_branch
        %421 = sbr.rel (%p419) target = $region64
      $region63: #{tpu_custom_call.1} parent=11 // pred_region
        _
      $region64: #{tpu_custom_call.1} parent=11 // pred_fallthru
        _
      // Predicated region
      $region65: #{tpu_custom_call.1} parent=11 // pred_check
        %p422 = pneg %p342
      $region66: #{tpu_custom_call.1} parent=11 // pred_check_branch
        %424 = sbr.rel (%p422) target = $region68
      $region67: #{tpu_custom_call.1} parent=11 // pred_region
        _
      $region68: #{tpu_custom_call.1} parent=11 // pred_fallthru
        _
    $region12: #{tpu_custom_call.1} parent=5 // pred_fallthru
      _
    %p425 = scmp.lt.s32.totalorder %s22, 2
    // Predicated region
    $region69: #{tpu_custom_call.1} parent=5 // pred_check
      %p426 = pneg %p425
    $region70: #{tpu_custom_call.1} parent=5 // pred_check_branch
      %428 = sbr.rel (%p426) target = $region72
    $region71: #{tpu_custom_call.1} parent=5 // pred_region
      // Predicated region
      $region73: #{tpu_custom_call.1} parent=71 // pred_check
        %p429 = pneg %p42
      $region74: #{tpu_custom_call.1} parent=71 // pred_check_branch
        %431 = sbr.rel (%p429) target = $region76
      $region75: #{tpu_custom_call.1} parent=71 // pred_region
        %s432 = smul.u32 6, %s22
        %p433 = scmp.lt.s32.totalorder %s432, 11
        %s434 = scalar_select %p433, %s432, 11
        %s435 = smul.addr %s434, 8
        %s436 = scalar_lea.vmem %s0, %s435
        %s437 = smul.u32 6, %s22
      $region76: #{tpu_custom_call.1} parent=71 // pred_fallthru
        _
    $region72: #{tpu_custom_call.1} parent=5 // pred_fallthru
      _
    %p438 = scmp.le.s32.totalorder 1, %s22
    %p439 = scmp.lt.s32.totalorder %s22, 3
    %p440 = pnand %p438, %p439
    %p441 = pneg %p440
    // Predicated region
    $region77: #{tpu_custom_call.1} parent=5 // pred_check
      _
    $region78: #{tpu_custom_call.1} parent=5 // pred_check_branch
      %443 = sbr.rel (%p440) target = $region80
    $region79: #{tpu_custom_call.1} parent=5 // pred_region
      %s444 = ssub.s32 %s22, 1
      %s445 = smul.u32 6, %s27
      %p446 = scmp.lt.s32.totalorder %s445, 11
      %s447 = scalar_select %p446, %s445, 11
      %s448 = smul.addr %s447, 8
      %s449 = scalar_lea.vmem %s0, %s448
      %p450 = pneg %p48
      %p451 = pneg %p45
      %p452 = pneg %p69
      %p453 = pneg %p66
      %p454 = pneg %p90
      %p455 = pneg %p87
      %p456 = pneg %p111
      %p457 = pneg %p108
      %p458 = pneg %p132
      %p459 = pneg %p129
      %p460 = pneg %p153
      %p461 = pneg %p150
      %p462 = pneg %p174
      %p463 = pneg %p171
      %p464 = pneg %p195
      %p465 = pneg %p192
      %p466 = pneg %p216
      %p467 = pneg %p213
      %p468 = pneg %p237
      %p469 = pneg %p234
      %p470 = pneg %p258
      %p471 = pneg %p255
      %p472 = pneg %p279
      %p473 = pneg %p276
      %p474 = pneg %p300
      %p475 = pneg %p297
      %p476 = pneg %p321
      %p477 = pneg %p318
      %p478 = pneg %p342
      %p479 = pneg %p339
      %p480 = pneg %p368
      %p481 = pneg %p365
      %p482 = scmp.lt.s32.totalorder %s27, 1
      %s483 = scalar_select %p482, %s27, 1
      %s484 = smul.addr %s483, 4
      %s485 = scalar_lea.vmem %s15, %s484
      %s486 = smul.u32 6, %s27
      %p487 = scmp.lt.s32.totalorder %s486, 11
      %s488 = scalar_select %p487, %s486, 11
      %s489 = smul.addr %s488, 8
      %s490 = scalar_lea.vmem %s0, %s489
      %s491 = smul.u32 6, %s27
      %p492 = scmp.lt.s32.totalorder %s27, 1
      %s493 = scalar_select %p492, %s27, 1
      %s494 = smul.addr %s493, 4
      %s495 = scalar_lea.vmem %s15, %s494
      %v496 = vld [vmem:[%s490] sm:$0xff]
      %v497 = vld [vmem:[%s490 + $0x8] sm:$0xff]
      %v498 = vld [vmem:[%s490 + $0x10] sm:$0xff]
      %v499 = vld [vmem:[%s490 + $0x18] sm:$0xff]
      %v500 = vld [vmem:[%s490 + $0x20] sm:$0xff]
      %v501 = vld [vmem:[%s490 + $0x28] sm:$0xff]
      %v502 = vld [vmem:[%s9] sm:$0xff]
      %v503 = vld [vmem:[%s9 + $0x8] sm:$0xff]
      %v504 = vld [vmem:[%s9 + $0x10] sm:$0xff]
      %v505 = vld [vmem:[%s9 + $0x18] sm:$0xff]
      %v506 = vld [vmem:[%s9 + $0x20] sm:$0xff]
      %v507 = vld [vmem:[%s9 + $0x28] sm:$0xff]
      %v508 = vld [vmem:[%s10] sm:$0xff]
      %v509 = vld [vmem:[%s10 + $0x8] sm:$0xff]
      %v510 = vld [vmem:[%s10 + $0x10] sm:$0xff]
      %v511 = vld [vmem:[%s10 + $0x18] sm:$0xff]
      %v512 = vld [vmem:[%s10 + $0x20] sm:$0xff]
      %v513 = vld [vmem:[%s10 + $0x28] sm:$0xff]
      %v514 = vrot.slane %v496, 7
      %v515 = vrot.slane %v497, 7
      %v516 = vrot.slane %v498, 7
      %v517 = vrot.slane %v499, 7
      %v518 = vrot.slane %v500, 7
      %v519 = vrot.slane %v501, 7
      %v520 = vlaneseq
      %v521 = vshrl.u32 %v520, 7
      %vm522 = vcmp.lt.s32.totalorder %v521, 1
      %v523 = vsel %vm522, %v518, %v519
      %v524 = vsel %vm522, %v517, %v518
      %v525 = vsel %vm522, %v516, %v517
      %v526 = vsel %vm522, %v515, %v516
      %v527 = vsel %vm522, %v514, %v515
      %v528 = vsel %vm522, %v519, %v514
      %530 = vset.pattern.permute.xlu0 0
      %531 = vperm.xlu0 %530, %v502
      %v532 = vpop.permute.xlu0 %531
      %535 = vset.pattern.permute.xlu0 0
      %536 = vperm.xlu0 %535, %v503
      %v537 = vpop.permute.xlu0 %536
      %540 = vset.pattern.permute.xlu0 0
      %541 = vperm.xlu0 %540, %v504
      %v542 = vpop.permute.xlu0 %541
      %545 = vset.pattern.permute.xlu0 0
      %546 = vperm.xlu0 %545, %v505
      %v547 = vpop.permute.xlu0 %546
      %550 = vset.pattern.permute.xlu0 0
      %551 = vperm.xlu0 %550, %v506
      %v552 = vpop.permute.xlu0 %551
      %555 = vset.pattern.permute.xlu0 0
      %556 = vperm.xlu0 %555, %v507
      %v557 = vpop.permute.xlu0 %556
      %v559 = vmul.f32 %v528, %v532
      %v560 = vmul.f32 %v527, %v537
      %v561 = vmul.f32 %v526, %v542
      %v562 = vmul.f32 %v525, %v547
      %v563 = vmul.f32 %v524, %v552
      %v564 = vmul.f32 %v523, %v557
      %v565 = vrot.slane %v496, 1
      %v566 = vrot.slane %v497, 1
      %v567 = vrot.slane %v498, 1
      %v568 = vrot.slane %v499, 1
      %v569 = vrot.slane %v500, 1
      %v570 = vrot.slane %v501, 1
      %vm571 = vcmp.lt.s32.totalorder %v521, 7
      %v572 = vsel %vm571, %v569, %v570
      %v573 = vsel %vm571, %v568, %v569
      %v574 = vsel %vm571, %v567, %v568
      %v575 = vsel %vm571, %v566, %v567
      %v576 = vsel %vm571, %v565, %v566
      %v577 = vsel %vm571, %v570, %v565
      %579 = vset.pattern.permute.xlu0 0
      %580 = vperm.xlu0 %579, %v508
      %v581 = vpop.permute.xlu0 %580
      %584 = vset.pattern.permute.xlu0 0
      %585 = vperm.xlu0 %584, %v509
      %v586 = vpop.permute.xlu0 %585
      %589 = vset.pattern.permute.xlu0 0
      %590 = vperm.xlu0 %589, %v510
      %v591 = vpop.permute.xlu0 %590
      %594 = vset.pattern.permute.xlu0 0
      %595 = vperm.xlu0 %594, %v511
      %v596 = vpop.permute.xlu0 %595
      %599 = vset.pattern.permute.xlu0 0
      %600 = vperm.xlu0 %599, %v512
      %v601 = vpop.permute.xlu0 %600
      %604 = vset.pattern.permute.xlu0 0
      %605 = vperm.xlu0 %604, %v513
      %v606 = vpop.permute.xlu0 %605
      %v608 = vmul.f32 %v576, %v581
      %v609 = vmul.f32 %v575, %v586
      %v610 = vmul.f32 %v574, %v591
      %v611 = vmul.f32 %v573, %v596
      %v612 = vmul.f32 %v572, %v601
      %v613 = vmul.f32 %v577, %v606
      %v614 = vld [vmem:[%s1] sm:$0xff]
      %v615 = vld [vmem:[%s1 + $0x8] sm:$0xff]
      %s616 = scalar_lea.vmem %s1, 16
      %v617 = vld [vmem:[%s616] sm:$0xff]
      %v618 = vld [vmem:[%s616 + $0x8] sm:$0xff]
      %vm619 = vcmask 130048
      %v621 = vsel %vm619, %v496, 0
      %v624 = vsel %vm619, %v497, 0
      %v627 = vsel %vm619, %v498, 0
      %v630 = vsel %vm619, %v499, 0
      %v633 = vsel %vm619, %v500, 0
      %v636 = vsel %vm619, %v501, 0
      %638 = vmatpush.msra.mxu0 0.0
      %639 = vmatpush.msra.mxu0 0.0
      %640 = vmatpush.msra.mxu0 0.0
      %641 = vmatpush.msra.mxu0 0.0
      %642 = vmatpush.msra.mxu0 0.0
      %643 = vmatpush.msra.mxu0 0.0
      %644 = vmatpush.msra.mxu0 0.0
      %645 = vmatpush.msra.mxu0 0.0
      %646 = vmatpush.msra.mxu0 0.0
      %647 = vmatpush.msra.mxu0 0.0
      %648 = vmatpush.msra.mxu0 0.0
      %649 = vmatpush.msra.mxu0 0.0
      %650 = vmatpush.msra.mxu0 0.0
      %651 = vmatpush.msra.mxu0 0.0
      %652 = vmatpush.msra.mxu0 %v618
      %653 = vmatpush.msra.mxu0 %v617
      %654 = vmatmul.f32.gmra.mxu0 %v621
      %v655 = vpop.f32.mrf.mxu0
      %v656 = vadd.f32 0.0, %v655
      %657 = vmatmul.f32.gmra.mxu0 %v624
      %v658 = vpop.f32.mrf.mxu0
      %v659 = vadd.f32 0.0, %v658
      %660 = vmatmul.f32.gmra.mxu0 %v627
      %v661 = vpop.f32.mrf.mxu0
      %v662 = vadd.f32 0.0, %v661
      %663 = vmatmul.f32.gmra.mxu0 %v630
      %v664 = vpop.f32.mrf.mxu0
      %v665 = vadd.f32 0.0, %v664
      %666 = vmatmul.f32.gmra.mxu0 %v633
      %v667 = vpop.f32.mrf.mxu0
      %v668 = vadd.f32 0.0, %v667
      %669 = vmatmul.f32.gmra.mxu0 %v636
      %v670 = vpop.f32.mrf.mxu0
      %v671 = vadd.f32 0.0, %v670
      %672 = vdwg.mxu0
      %v674 = vsel %vm619, %v559, 0
      %v677 = vsel %vm619, %v560, 0
      %v680 = vsel %vm619, %v561, 0
      %v683 = vsel %vm619, %v562, 0
      %v686 = vsel %vm619, %v563, 0
      %v689 = vsel %vm619, %v564, 0
      %691 = vmatpush.msra.mxu0 0.0
      %692 = vmatpush.msra.mxu0 0.0
      %693 = vmatpush.msra.mxu0 0.0
      %694 = vmatpush.msra.mxu0 0.0
      %695 = vmatpush.msra.mxu0 0.0
      %696 = vmatpush.msra.mxu0 0.0
      %697 = vmatpush.msra.mxu0 0.0
      %698 = vmatpush.msra.mxu0 0.0
      %699 = vmatpush.msra.mxu0 0.0
      %700 = vmatpush.msra.mxu0 0.0
      %701 = vmatpush.msra.mxu0 0.0
      %702 = vmatpush.msra.mxu0 0.0
      %703 = vmatpush.msra.mxu0 0.0
      %704 = vmatpush.msra.mxu0 0.0
      %705 = vmatpush.msra.mxu0 %v615
      %706 = vmatpush.msra.mxu0 %v614
      %707 = vmatmul.f32.gmra.mxu0 %v674
      %v708 = vpop.f32.mrf.mxu0
      %v709 = vadd.f32 %v656, %v708
      %710 = vmatmul.f32.gmra.mxu0 %v677
      %v711 = vpop.f32.mrf.mxu0
      %v712 = vadd.f32 %v659, %v711
      %713 = vmatmul.f32.gmra.mxu0 %v680
      %v714 = vpop.f32.mrf.mxu0
      %v715 = vadd.f32 %v662, %v714
      %716 = vmatmul.f32.gmra.mxu0 %v683
      %v717 = vpop.f32.mrf.mxu0
      %v718 = vadd.f32 %v665, %v717
      %719 = vmatmul.f32.gmra.mxu0 %v686
      %v720 = vpop.f32.mrf.mxu0
      %v721 = vadd.f32 %v668, %v720
      %722 = vmatmul.f32.gmra.mxu0 %v689
      %v723 = vpop.f32.mrf.mxu0
      %v724 = vadd.f32 %v671, %v723
      %725 = vdwg.mxu0
      %s726 = scalar_lea.vmem %s1, 32
      %v727 = vld [vmem:[%s726] sm:$0xff]
      %v728 = vld [vmem:[%s726 + $0x8] sm:$0xff]
      %v730 = vsel %vm619, %v608, 0
      %v733 = vsel %vm619, %v609, 0
      %v736 = vsel %vm619, %v610, 0
      %v739 = vsel %vm619, %v611, 0
      %v742 = vsel %vm619, %v612, 0
      %v745 = vsel %vm619, %v613, 0
      %747 = vmatpush.msra.mxu0 0.0
      %748 = vmatpush.msra.mxu0 0.0
      %749 = vmatpush.msra.mxu0 0.0
      %750 = vmatpush.msra.mxu0 0.0
      %751 = vmatpush.msra.mxu0 0.0
      %752 = vmatpush.msra.mxu0 0.0
      %753 = vmatpush.msra.mxu0 0.0
      %754 = vmatpush.msra.mxu0 0.0
      %755 = vmatpush.msra.mxu0 0.0
      %756 = vmatpush.msra.mxu0 0.0
      %757 = vmatpush.msra.mxu0 0.0
      %758 = vmatpush.msra.mxu0 0.0
      %759 = vmatpush.msra.mxu0 0.0
      %760 = vmatpush.msra.mxu0 0.0
      %761 = vmatpush.msra.mxu0 %v728
      %762 = vmatpush.msra.mxu0 %v727
      %763 = vmatmul.f32.gmra.mxu0 %v730
      %v764 = vpop.f32.mrf.mxu0
      %v765 = vadd.f32 0.0, %v764
      %766 = vmatmul.f32.gmra.mxu0 %v733
      %v767 = vpop.f32.mrf.mxu0
      %v768 = vadd.f32 0.0, %v767
      %769 = vmatmul.f32.gmra.mxu0 %v736
      %v770 = vpop.f32.mrf.mxu0
      %v771 = vadd.f32 0.0, %v770
      %772 = vmatmul.f32.gmra.mxu0 %v739
      %v773 = vpop.f32.mrf.mxu0
      %v774 = vadd.f32 0.0, %v773
      %775 = vmatmul.f32.gmra.mxu0 %v742
      %v776 = vpop.f32.mrf.mxu0
      %v777 = vadd.f32 0.0, %v776
      %778 = vmatmul.f32.gmra.mxu0 %v745
      %v779 = vpop.f32.mrf.mxu0
      %v780 = vadd.f32 0.0, %v779
      %781 = vdwg.mxu0
      %v782 = vadd.f32 %v709, %v765
      %v783 = vadd.f32 %v712, %v768
      %v784 = vadd.f32 %v715, %v771
      %v785 = vadd.f32 %v718, %v774
      %v786 = vadd.f32 %v721, %v777
      %v787 = vadd.f32 %v724, %v780
      %v788 = vld [vmem:[%s2] sm:$0x1]
      %v790 = vperm.slane %v788, 0
      %v792 = vadd.f32 %v782, %v790
      %v793 = vadd.f32 %v783, %v790
      %v794 = vadd.f32 %v784, %v790
      %v795 = vadd.f32 %v785, %v790
      %v796 = vadd.f32 %v786, %v790
      %v797 = vadd.f32 %v787, %v790
      %v798 = vmax.f32 %v792, 0.0
      %v799 = vmax.f32 %v793, 0.0
      %v800 = vmax.f32 %v794, 0.0
      %v801 = vmax.f32 %v795, 0.0
      %v802 = vmax.f32 %v796, 0.0
      %v803 = vmax.f32 %v797, 0.0
      %v804 = vld [vmem:[%s11] sm:$0x7]
      %v805 = vld [vmem:[%s12] sm:$0xff]
      %v806 = vld [vmem:[%s12 + $0x8] sm:$0xff]
      %v807 = vld [vmem:[%s12 + $0x10] sm:$0xff]
      %v808 = vld [vmem:[%s12 + $0x18] sm:$0xff]
      %v809 = vld [vmem:[%s12 + $0x20] sm:$0xff]
      %v810 = vld [vmem:[%s12 + $0x28] sm:$0xff]
      %vm811 = vcmask 392192
      %v813 = vsel %vm811, %v804, 0
      %815 = vmatpush.msra.mxu0 0.0
      %816 = vmatpush.msra.mxu0 0.0
      %817 = vmatpush.msra.mxu0 0.0
      %818 = vmatpush.msra.mxu0 0.0
      %819 = vmatpush.msra.mxu0 0.0
      %820 = vmatpush.msra.mxu0 0.0
      %821 = vmatpush.msra.mxu0 0.0
      %822 = vmatpush.msra.mxu0 0.0
      %823 = vmatpush.msra.mxu0 0.0
      %824 = vmatpush.msra.mxu0 0.0
      %825 = vmatpush.msra.mxu0 %v803
      %826 = vmatpush.msra.mxu0 %v802
      %827 = vmatpush.msra.mxu0 %v801
      %828 = vmatpush.msra.mxu0 %v800
      %829 = vmatpush.msra.mxu0 %v799
      %830 = vmatpush.msra.mxu0 %v798
      %831 = vmatmul.f32.gmra.mxu0 %v813
      %v832 = vpop.f32.mrf.mxu0
      %v833 = vadd.f32 0.0, %v832
      %834 = vdwg.mxu0
      %v835 = vmul.f32 %v798, %v798
      %v836 = vmul.f32 %v799, %v799
      %v837 = vmul.f32 %v800, %v800
      %v838 = vmul.f32 %v801, %v801
      %v839 = vmul.f32 %v802, %v802
      %v840 = vmul.f32 %v803, %v803
      %841 = vmatpush.msra.mxu0 0.0
      %842 = vmatpush.msra.mxu0 0.0
      %843 = vmatpush.msra.mxu0 0.0
      %844 = vmatpush.msra.mxu0 0.0
      %845 = vmatpush.msra.mxu0 0.0
      %846 = vmatpush.msra.mxu0 0.0
      %847 = vmatpush.msra.mxu0 0.0
      %848 = vmatpush.msra.mxu0 0.0
      %849 = vmatpush.msra.mxu0 0.0
      %850 = vmatpush.msra.mxu0 0.0
      %851 = vmatpush.msra.mxu0 %v840
      %852 = vmatpush.msra.mxu0 %v839
      %853 = vmatpush.msra.mxu0 %v838
      %854 = vmatpush.msra.mxu0 %v837
      %855 = vmatpush.msra.mxu0 %v836
      %856 = vmatpush.msra.mxu0 %v835
      %857 = vmatmul.f32.gmra.mxu0 %v813
      %v858 = vpop.f32.mrf.mxu0
      %v859 = vadd.f32 0.0, %v858
      %860 = vdwg.mxu0
      %v861 = vmul.f32 %v833, %v833
      %v862 = vsub.f32 %v859, %v861
      %v863 = vadd.f32 %v862, 1e-05
      %v864 = vrsqrt.pop %v863
      %v865 = vmul.f32 %v864, %v863
      %v866 = vmul.f32 %v865, %v864
      %v867 = vmul.f32 0.5, %v866
      %v868 = vsub.f32 1.5, %v867
      %v869 = vmul.f32 %v864, %v868
      %vm870 = vweird.f32 %v863
      %vm871 = vweird.f32 %v864
      %vm872 = vmor %vm870, %vm871
      %v873 = vsel %vm872, %v864, %v869
      %vm874 = vcmask 23552
      %v876 = vsel %vm874, %v805, 0
      %v879 = vsel %vm874, %v806, 0
      %v882 = vsel %vm874, %v807, 0
      %v885 = vsel %vm874, %v808, 0
      %v888 = vsel %vm874, %v809, 0
      %v891 = vsel %vm874, %v810, 0
      %vm893 = vcmask 1042432
      %v895 = vsel %vm893, %v833, 0
      %897 = vmatpush.msra.mxu0 0.0
      %898 = vmatpush.msra.mxu0 0.0
      %899 = vmatpush.msra.mxu0 0.0
      %900 = vmatpush.msra.mxu0 0.0
      %901 = vmatpush.msra.mxu0 0.0
      %902 = vmatpush.msra.mxu0 0.0
      %903 = vmatpush.msra.mxu0 0.0
      %904 = vmatpush.msra.mxu0 0.0
      %905 = vmatpush.msra.mxu0 0.0
      %906 = vmatpush.msra.mxu0 0.0
      %907 = vmatpush.msra.mxu0 0.0
      %908 = vmatpush.msra.mxu0 0.0
      %909 = vmatpush.msra.mxu0 0.0
      %910 = vmatpush.msra.mxu0 0.0
      %911 = vmatpush.msra.mxu0 0.0
      %912 = vmatpush.msra.mxu0 %v895
      %913 = vmatmul.f32.gmra.mxu0 %v876
      %v914 = vpop.f32.mrf.mxu0
      %v915 = vadd.f32 0.0, %v914
      %916 = vmatmul.f32.gmra.mxu0 %v879
      %v917 = vpop.f32.mrf.mxu0
      %v918 = vadd.f32 0.0, %v917
      %919 = vmatmul.f32.gmra.mxu0 %v882
      %v920 = vpop.f32.mrf.mxu0
      %v921 = vadd.f32 0.0, %v920
      %922 = vmatmul.f32.gmra.mxu0 %v885
      %v923 = vpop.f32.mrf.mxu0
      %v924 = vadd.f32 0.0, %v923
      %925 = vmatmul.f32.gmra.mxu0 %v888
      %v926 = vpop.f32.mrf.mxu0
      %v927 = vadd.f32 0.0, %v926
      %928 = vmatmul.f32.gmra.mxu0 %v891
      %v929 = vpop.f32.mrf.mxu0
      %v930 = vadd.f32 0.0, %v929
      %931 = vdwg.mxu0
      %v933 = vsel %vm893, %v873, 0
      %935 = vmatpush.msra.mxu0 0.0
      %936 = vmatpush.msra.mxu0 0.0
      %937 = vmatpush.msra.mxu0 0.0
      %938 = vmatpush.msra.mxu0 0.0
      %939 = vmatpush.msra.mxu0 0.0
      %940 = vmatpush.msra.mxu0 0.0
      %941 = vmatpush.msra.mxu0 0.0
      %942 = vmatpush.msra.mxu0 0.0
      %943 = vmatpush.msra.mxu0 0.0
      %944 = vmatpush.msra.mxu0 0.0
      %945 = vmatpush.msra.mxu0 0.0
      %946 = vmatpush.msra.mxu0 0.0
      %947 = vmatpush.msra.mxu0 0.0
      %948 = vmatpush.msra.mxu0 0.0
      %949 = vmatpush.msra.mxu0 0.0
      %950 = vmatpush.msra.mxu0 %v933
      %951 = vmatmul.f32.gmra.mxu0 %v876
      %v952 = vpop.f32.mrf.mxu0
      %v953 = vadd.f32 0.0, %v952
      %954 = vmatmul.f32.gmra.mxu0 %v879
      %v955 = vpop.f32.mrf.mxu0
      %v956 = vadd.f32 0.0, %v955
      %957 = vmatmul.f32.gmra.mxu0 %v882
      %v958 = vpop.f32.mrf.mxu0
      %v959 = vadd.f32 0.0, %v958
      %960 = vmatmul.f32.gmra.mxu0 %v885
      %v961 = vpop.f32.mrf.mxu0
      %v962 = vadd.f32 0.0, %v961
      %963 = vmatmul.f32.gmra.mxu0 %v888
      %v964 = vpop.f32.mrf.mxu0
      %v965 = vadd.f32 0.0, %v964
      %966 = vmatmul.f32.gmra.mxu0 %v891
      %v967 = vpop.f32.mrf.mxu0
      %v968 = vadd.f32 0.0, %v967
      %969 = vdwg.mxu0
      %v970 = vsub.f32 %v798, %v915
      %v971 = vsub.f32 %v799, %v918
      %v972 = vsub.f32 %v800, %v921
      %v973 = vsub.f32 %v801, %v924
      %v974 = vsub.f32 %v802, %v927
      %v975 = vsub.f32 %v803, %v930
      %v976 = vmul.f32 %v970, %v953
      %v977 = vmul.f32 %v971, %v956
      %v978 = vmul.f32 %v972, %v959
      %v979 = vmul.f32 %v973, %v962
      %v980 = vmul.f32 %v974, %v965
      %v981 = vmul.f32 %v975, %v968
      %v982 = vld [vmem:[%s3] sm:$0xff]
      %v983 = vld [vmem:[%s3 + $0x8] sm:$0xff]
      %v984 = vld [vmem:[%s3 + $0x10] sm:$0xff]
      %v985 = vld [vmem:[%s3 + $0x18] sm:$0xff]
      %v986 = vld [vmem:[%s3 + $0x20] sm:$0xff]
      %v987 = vld [vmem:[%s3 + $0x28] sm:$0xff]
      %989 = vset.pattern.permute.xlu0 0
      %990 = vperm.xlu0 %989, %v982
      %v991 = vpop.permute.xlu0 %990
      %994 = vset.pattern.permute.xlu0 0
      %995 = vperm.xlu0 %994, %v983
      %v996 = vpop.permute.xlu0 %995
      %999 = vset.pattern.permute.xlu0 0
      %1000 = vperm.xlu0 %999, %v984
      %v1001 = vpop.permute.xlu0 %1000
      %1004 = vset.pattern.permute.xlu0 0
      %1005 = vperm.xlu0 %1004, %v985
      %v1006 = vpop.permute.xlu0 %1005
      %1009 = vset.pattern.permute.xlu0 0
      %1010 = vperm.xlu0 %1009, %v986
      %v1011 = vpop.permute.xlu0 %1010
      %1014 = vset.pattern.permute.xlu0 0
      %1015 = vperm.xlu0 %1014, %v987
      %v1016 = vpop.permute.xlu0 %1015
      %v1018 = vmul.f32 %v976, %v991
      %v1019 = vmul.f32 %v977, %v996
      %v1020 = vmul.f32 %v978, %v1001
      %v1021 = vmul.f32 %v979, %v1006
      %v1022 = vmul.f32 %v980, %v1011
      %v1023 = vmul.f32 %v981, %v1016
      %v1024 = vld [vmem:[%s4] sm:$0xff]
      %v1025 = vld [vmem:[%s4 + $0x8] sm:$0xff]
      %v1026 = vld [vmem:[%s4 + $0x10] sm:$0xff]
      %v1027 = vld [vmem:[%s4 + $0x18] sm:$0xff]
      %v1028 = vld [vmem:[%s4 + $0x20] sm:$0xff]
      %v1029 = vld [vmem:[%s4 + $0x28] sm:$0xff]
      %1031 = vset.pattern.permute.xlu0 0
      %1032 = vperm.xlu0 %1031, %v1024
      %v1033 = vpop.permute.xlu0 %1032
      %1036 = vset.pattern.permute.xlu0 0
      %1037 = vperm.xlu0 %1036, %v1025
      %v1038 = vpop.permute.xlu0 %1037
      %1041 = vset.pattern.permute.xlu0 0
      %1042 = vperm.xlu0 %1041, %v1026
      %v1043 = vpop.permute.xlu0 %1042
      %1046 = vset.pattern.permute.xlu0 0
      %1047 = vperm.xlu0 %1046, %v1027
      %v1048 = vpop.permute.xlu0 %1047
      %1051 = vset.pattern.permute.xlu0 0
      %1052 = vperm.xlu0 %1051, %v1028
      %v1053 = vpop.permute.xlu0 %1052
      %1056 = vset.pattern.permute.xlu0 0
      %1057 = vperm.xlu0 %1056, %v1029
      %v1058 = vpop.permute.xlu0 %1057
      %v1060 = vadd.f32 %v1018, %v1033
      %v1061 = vadd.f32 %v1019, %v1038
      %v1062 = vadd.f32 %v1020, %v1043
      %v1063 = vadd.f32 %v1021, %v1048
      %v1064 = vadd.f32 %v1022, %v1053
      %v1065 = vadd.f32 %v1023, %v1058
      %v1066 = vrot.slane %v1060, 7
      %v1067 = vrot.slane %v1061, 7
      %v1068 = vrot.slane %v1062, 7
      %v1069 = vrot.slane %v1063, 7
      %v1070 = vrot.slane %v1064, 7
      %v1071 = vrot.slane %v1065, 7
      %v1072 = vsel %vm522, %v1070, %v1071
      %v1073 = vsel %vm522, %v1069, %v1070
      %v1074 = vsel %vm522, %v1068, %v1069
      %v1075 = vsel %vm522, %v1067, %v1068
      %v1076 = vsel %vm522, %v1066, %v1067
      %v1077 = vsel %vm522, %v1071, %v1066
      %v1078 = vmul.f32 %v1077, %v532
      %v1079 = vmul.f32 %v1076, %v537
      %v1080 = vmul.f32 %v1075, %v542
      %v1081 = vmul.f32 %v1074, %v547
      %v1082 = vmul.f32 %v1073, %v552
      %v1083 = vmul.f32 %v1072, %v557
      %v1084 = vrot.slane %v1060, 1
      %v1085 = vrot.slane %v1061, 1
      %v1086 = vrot.slane %v1062, 1
      %v1087 = vrot.slane %v1063, 1
      %v1088 = vrot.slane %v1064, 1
      %v1089 = vrot.slane %v1065, 1
      %v1090 = vsel %vm571, %v1088, %v1089
      %v1091 = vsel %vm571, %v1087, %v1088
      %v1092 = vsel %vm571, %v1086, %v1087
      %v1093 = vsel %vm571, %v1085, %v1086
      %v1094 = vsel %vm571, %v1084, %v1085
      %v1095 = vsel %vm571, %v1089, %v1084
      %v1096 = vmul.f32 %v1094, %v581
      %v1097 = vmul.f32 %v1093, %v586
      %v1098 = vmul.f32 %v1092, %v591
      %v1099 = vmul.f32 %v1091, %v596
      %v1100 = vmul.f32 %v1090, %v601
      %v1101 = vmul.f32 %v1095, %v606
      %v1102 = vld [vmem:[%s5] sm:$0xff]
      %v1103 = vld [vmem:[%s5 + $0x8] sm:$0xff]
      %s1104 = scalar_lea.vmem %s5, 16
      %v1105 = vld [vmem:[%s1104] sm:$0xff]
      %v1106 = vld [vmem:[%s1104 + $0x8] sm:$0xff]
      %v1108 = vsel %vm619, %v1060, 0
      %v1111 = vsel %vm619, %v1061, 0
      %v1114 = vsel %vm619, %v1062, 0
      %v1117 = vsel %vm619, %v1063, 0
      %v1120 = vsel %vm619, %v1064, 0
      %v1123 = vsel %vm619, %v1065, 0
      %1125 = vmatpush.msra.mxu0 0.0
      %1126 = vmatpush.msra.mxu0 0.0
      %1127 = vmatpush.msra.mxu0 0.0
      %1128 = vmatpush.msra.mxu0 0.0
      %1129 = vmatpush.msra.mxu0 0.0
      %1130 = vmatpush.msra.mxu0 0.0
      %1131 = vmatpush.msra.mxu0 0.0
      %1132 = vmatpush.msra.mxu0 0.0
      %1133 = vmatpush.msra.mxu0 0.0
      %1134 = vmatpush.msra.mxu0 0.0
      %1135 = vmatpush.msra.mxu0 0.0
      %1136 = vmatpush.msra.mxu0 0.0
      %1137 = vmatpush.msra.mxu0 0.0
      %1138 = vmatpush.msra.mxu0 0.0
      %1139 = vmatpush.msra.mxu0 %v1106
      %1140 = vmatpush.msra.mxu0 %v1105
      %1141 = vmatmul.f32.gmra.mxu0 %v1108
      %v1142 = vpop.f32.mrf.mxu0
      %v1143 = vadd.f32 0.0, %v1142
      %1144 = vmatmul.f32.gmra.mxu0 %v1111
      %v1145 = vpop.f32.mrf.mxu0
      %v1146 = vadd.f32 0.0, %v1145
      %1147 = vmatmul.f32.gmra.mxu0 %v1114
      %v1148 = vpop.f32.mrf.mxu0
      %v1149 = vadd.f32 0.0, %v1148
      %1150 = vmatmul.f32.gmra.mxu0 %v1117
      %v1151 = vpop.f32.mrf.mxu0
      %v1152 = vadd.f32 0.0, %v1151
      %1153 = vmatmul.f32.gmra.mxu0 %v1120
      %v1154 = vpop.f32.mrf.mxu0
      %v1155 = vadd.f32 0.0, %v1154
      %1156 = vmatmul.f32.gmra.mxu0 %v1123
      %v1157 = vpop.f32.mrf.mxu0
      %v1158 = vadd.f32 0.0, %v1157
      %1159 = vdwg.mxu0
      %v1161 = vsel %vm619, %v1078, 0
      %v1164 = vsel %vm619, %v1079, 0
      %v1167 = vsel %vm619, %v1080, 0
      %v1170 = vsel %vm619, %v1081, 0
      %v1173 = vsel %vm619, %v1082, 0
      %v1176 = vsel %vm619, %v1083, 0
      %1178 = vmatpush.msra.mxu0 0.0
      %1179 = vmatpush.msra.mxu0 0.0
      %1180 = vmatpush.msra.mxu0 0.0
      %1181 = vmatpush.msra.mxu0 0.0
      %1182 = vmatpush.msra.mxu0 0.0
      %1183 = vmatpush.msra.mxu0 0.0
      %1184 = vmatpush.msra.mxu0 0.0
      %1185 = vmatpush.msra.mxu0 0.0
      %1186 = vmatpush.msra.mxu0 0.0
      %1187 = vmatpush.msra.mxu0 0.0
      %1188 = vmatpush.msra.mxu0 0.0
      %1189 = vmatpush.msra.mxu0 0.0
      %1190 = vmatpush.msra.mxu0 0.0
      %1191 = vmatpush.msra.mxu0 0.0
      %1192 = vmatpush.msra.mxu0 %v1103
      %1193 = vmatpush.msra.mxu0 %v1102
      %1194 = vmatmul.f32.gmra.mxu0 %v1161
      %v1195 = vpop.f32.mrf.mxu0
      %v1196 = vadd.f32 %v1143, %v1195
      %1197 = vmatmul.f32.gmra.mxu0 %v1164
      %v1198 = vpop.f32.mrf.mxu0
      %v1199 = vadd.f32 %v1146, %v1198
      %1200 = vmatmul.f32.gmra.mxu0 %v1167
      %v1201 = vpop.f32.mrf.mxu0
      %v1202 = vadd.f32 %v1149, %v1201
      %1203 = vmatmul.f32.gmra.mxu0 %v1170
      %v1204 = vpop.f32.mrf.mxu0
      %v1205 = vadd.f32 %v1152, %v1204
      %1206 = vmatmul.f32.gmra.mxu0 %v1173
      %v1207 = vpop.f32.mrf.mxu0
      %v1208 = vadd.f32 %v1155, %v1207
      %1209 = vmatmul.f32.gmra.mxu0 %v1176
      %v1210 = vpop.f32.mrf.mxu0
      %v1211 = vadd.f32 %v1158, %v1210
      %1212 = vdwg.mxu0
      %s1213 = scalar_lea.vmem %s5, 32
      %v1214 = vld [vmem:[%s1213] sm:$0xff]
      %v1215 = vld [vmem:[%s1213 + $0x8] sm:$0xff]
      %v1217 = vsel %vm619, %v1096, 0
      %v1220 = vsel %vm619, %v1097, 0
      %v1223 = vsel %vm619, %v1098, 0
      %v1226 = vsel %vm619, %v1099, 0
      %v1229 = vsel %vm619, %v1100, 0
      %v1232 = vsel %vm619, %v1101, 0
      %1234 = vmatpush.msra.mxu0 0.0
      %1235 = vmatpush.msra.mxu0 0.0
      %1236 = vmatpush.msra.mxu0 0.0
      %1237 = vmatpush.msra.mxu0 0.0
      %1238 = vmatpush.msra.mxu0 0.0
      %1239 = vmatpush.msra.mxu0 0.0
      %1240 = vmatpush.msra.mxu0 0.0
      %1241 = vmatpush.msra.mxu0 0.0
      %1242 = vmatpush.msra.mxu0 0.0
      %1243 = vmatpush.msra.mxu0 0.0
      %1244 = vmatpush.msra.mxu0 0.0
      %1245 = vmatpush.msra.mxu0 0.0
      %1246 = vmatpush.msra.mxu0 0.0
      %1247 = vmatpush.msra.mxu0 0.0
      %1248 = vmatpush.msra.mxu0 %v1215
      %1249 = vmatpush.msra.mxu0 %v1214
      %1250 = vmatmul.f32.gmra.mxu0 %v1217
      %v1251 = vpop.f32.mrf.mxu0
      %v1252 = vadd.f32 0.0, %v1251
      %1253 = vmatmul.f32.gmra.mxu0 %v1220
      %v1254 = vpop.f32.mrf.mxu0
      %v1255 = vadd.f32 0.0, %v1254
      %1256 = vmatmul.f32.gmra.mxu0 %v1223
      %v1257 = vpop.f32.mrf.mxu0
      %v1258 = vadd.f32 0.0, %v1257
      %1259 = vmatmul.f32.gmra.mxu0 %v1226
      %v1260 = vpop.f32.mrf.mxu0
      %v1261 = vadd.f32 0.0, %v1260
      %1262 = vmatmul.f32.gmra.mxu0 %v1229
      %v1263 = vpop.f32.mrf.mxu0
      %v1264 = vadd.f32 0.0, %v1263
      %1265 = vmatmul.f32.gmra.mxu0 %v1232
      %v1266 = vpop.f32.mrf.mxu0
      %v1267 = vadd.f32 0.0, %v1266
      %1268 = vdwg.mxu0
      %v1269 = vadd.f32 %v1196, %v1252
      %v1270 = vadd.f32 %v1199, %v1255
      %v1271 = vadd.f32 %v1202, %v1258
      %v1272 = vadd.f32 %v1205, %v1261
      %v1273 = vadd.f32 %v1208, %v1264
      %v1274 = vadd.f32 %v1211, %v1267
      %v1275 = vld [vmem:[%s6] sm:$0x1]
      %v1277 = vperm.slane %v1275, 0
      %v1279 = vadd.f32 %v1269, %v1277
      %v1280 = vadd.f32 %v1270, %v1277
      %v1281 = vadd.f32 %v1271, %v1277
      %v1282 = vadd.f32 %v1272, %v1277
      %v1283 = vadd.f32 %v1273, %v1277
      %v1284 = vadd.f32 %v1274, %v1277
      %v1285 = vmax.f32 %v1279, 0.0
      %v1286 = vmax.f32 %v1280, 0.0
      %v1287 = vmax.f32 %v1281, 0.0
      %v1288 = vmax.f32 %v1282, 0.0
      %v1289 = vmax.f32 %v1283, 0.0
      %v1290 = vmax.f32 %v1284, 0.0
      %1291 = vmatpush.msra.mxu0 0.0
      %1292 = vmatpush.msra.mxu0 0.0
      %1293 = vmatpush.msra.mxu0 0.0
      %1294 = vmatpush.msra.mxu0 0.0
      %1295 = vmatpush.msra.mxu0 0.0
      %1296 = vmatpush.msra.mxu0 0.0
      %1297 = vmatpush.msra.mxu0 0.0
      %1298 = vmatpush.msra.mxu0 0.0
      %1299 = vmatpush.msra.mxu0 0.0
      %1300 = vmatpush.msra.mxu0 0.0
      %1301 = vmatpush.msra.mxu0 %v1290
      %1302 = vmatpush.msra.mxu0 %v1289
      %1303 = vmatpush.msra.mxu0 %v1288
      %1304 = vmatpush.msra.mxu0 %v1287
      %1305 = vmatpush.msra.mxu0 %v1286
      %1306 = vmatpush.msra.mxu0 %v1285
      %1307 = vmatmul.f32.gmra.mxu0 %v813
      %v1308 = vpop.f32.mrf.mxu0
      %v1309 = vadd.f32 0.0, %v1308
      %1310 = vdwg.mxu0
      %v1311 = vmul.f32 %v1285, %v1285
      %v1312 = vmul.f32 %v1286, %v1286
      %v1313 = vmul.f32 %v1287, %v1287
      %v1314 = vmul.f32 %v1288, %v1288
      %v1315 = vmul.f32 %v1289, %v1289
      %v1316 = vmul.f32 %v1290, %v1290
      %1317 = vmatpush.msra.mxu0 0.0
      %1318 = vmatpush.msra.mxu0 0.0
      %1319 = vmatpush.msra.mxu0 0.0
      %1320 = vmatpush.msra.mxu0 0.0
      %1321 = vmatpush.msra.mxu0 0.0
      %1322 = vmatpush.msra.mxu0 0.0
      %1323 = vmatpush.msra.mxu0 0.0
      %1324 = vmatpush.msra.mxu0 0.0
      %1325 = vmatpush.msra.mxu0 0.0
      %1326 = vmatpush.msra.mxu0 0.0
      %1327 = vmatpush.msra.mxu0 %v1316
      %1328 = vmatpush.msra.mxu0 %v1315
      %1329 = vmatpush.msra.mxu0 %v1314
      %1330 = vmatpush.msra.mxu0 %v1313
      %1331 = vmatpush.msra.mxu0 %v1312
      %1332 = vmatpush.msra.mxu0 %v1311
      %1333 = vmatmul.f32.gmra.mxu0 %v813
      %v1334 = vpop.f32.mrf.mxu0
      %v1335 = vadd.f32 0.0, %v1334
      %1336 = vdwg.mxu0
      %v1337 = vmul.f32 %v1309, %v1309
      %v1338 = vsub.f32 %v1335, %v1337
      %v1339 = vadd.f32 %v1338, 1e-05
      %v1340 = vrsqrt.pop %v1339
      %v1341 = vmul.f32 %v1340, %v1339
      %v1342 = vmul.f32 %v1341, %v1340
      %v1343 = vmul.f32 0.5, %v1342
      %v1344 = vsub.f32 1.5, %v1343
      %v1345 = vmul.f32 %v1340, %v1344
      %vm1346 = vweird.f32 %v1339
      %vm1347 = vweird.f32 %v1340
      %vm1348 = vmor %vm1346, %vm1347
      %v1349 = vsel %vm1348, %v1340, %v1345
      %v1351 = vsel %vm893, %v1309, 0
      %1353 = vmatpush.msra.mxu0 0.0
      %1354 = vmatpush.msra.mxu0 0.0
      %1355 = vmatpush.msra.mxu0 0.0
      %1356 = vmatpush.msra.mxu0 0.0
      %1357 = vmatpush.msra.mxu0 0.0
      %1358 = vmatpush.msra.mxu0 0.0
      %1359 = vmatpush.msra.mxu0 0.0
      %1360 = vmatpush.msra.mxu0 0.0
      %1361 = vmatpush.msra.mxu0 0.0
      %1362 = vmatpush.msra.mxu0 0.0
      %1363 = vmatpush.msra.mxu0 0.0
      %1364 = vmatpush.msra.mxu0 0.0
      %1365 = vmatpush.msra.mxu0 0.0
      %1366 = vmatpush.msra.mxu0 0.0
      %1367 = vmatpush.msra.mxu0 0.0
      %1368 = vmatpush.msra.mxu0 %v1351
      %1369 = vmatmul.f32.gmra.mxu0 %v876
      %v1370 = vpop.f32.mrf.mxu0
      %v1371 = vadd.f32 0.0, %v1370
      %1372 = vmatmul.f32.gmra.mxu0 %v879
      %v1373 = vpop.f32.mrf.mxu0
      %v1374 = vadd.f32 0.0, %v1373
      %1375 = vmatmul.f32.gmra.mxu0 %v882
      %v1376 = vpop.f32.mrf.mxu0
      %v1377 = vadd.f32 0.0, %v1376
      %1378 = vmatmul.f32.gmra.mxu0 %v885
      %v1379 = vpop.f32.mrf.mxu0
      %v1380 = vadd.f32 0.0, %v1379
      %1381 = vmatmul.f32.gmra.mxu0 %v888
      %v1382 = vpop.f32.mrf.mxu0
      %v1383 = vadd.f32 0.0, %v1382
      %1384 = vmatmul.f32.gmra.mxu0 %v891
      %v1385 = vpop.f32.mrf.mxu0
      %v1386 = vadd.f32 0.0, %v1385
      %1387 = vdwg.mxu0
      %v1389 = vsel %vm893, %v1349, 0
      %1391 = vmatpush.msra.mxu0 0.0
      %1392 = vmatpush.msra.mxu0 0.0
      %1393 = vmatpush.msra.mxu0 0.0
      %1394 = vmatpush.msra.mxu0 0.0
      %1395 = vmatpush.msra.mxu0 0.0
      %1396 = vmatpush.msra.mxu0 0.0
      %1397 = vmatpush.msra.mxu0 0.0
      %1398 = vmatpush.msra.mxu0 0.0
      %1399 = vmatpush.msra.mxu0 0.0
      %1400 = vmatpush.msra.mxu0 0.0
      %1401 = vmatpush.msra.mxu0 0.0
      %1402 = vmatpush.msra.mxu0 0.0
      %1403 = vmatpush.msra.mxu0 0.0
      %1404 = vmatpush.msra.mxu0 0.0
      %1405 = vmatpush.msra.mxu0 0.0
      %1406 = vmatpush.msra.mxu0 %v1389
      %1407 = vmatmul.f32.gmra.mxu0 %v876
      %v1408 = vpop.f32.mrf.mxu0
      %v1409 = vadd.f32 0.0, %v1408
      %1410 = vmatmul.f32.gmra.mxu0 %v879
      %v1411 = vpop.f32.mrf.mxu0
      %v1412 = vadd.f32 0.0, %v1411
      %1413 = vmatmul.f32.gmra.mxu0 %v882
      %v1414 = vpop.f32.mrf.mxu0
      %v1415 = vadd.f32 0.0, %v1414
      %1416 = vmatmul.f32.gmra.mxu0 %v885
      %v1417 = vpop.f32.mrf.mxu0
      %v1418 = vadd.f32 0.0, %v1417
      %1419 = vmatmul.f32.gmra.mxu0 %v888
      %v1420 = vpop.f32.mrf.mxu0
      %v1421 = vadd.f32 0.0, %v1420
      %1422 = vmatmul.f32.gmra.mxu0 %v891
      %v1423 = vpop.f32.mrf.mxu0
      %v1424 = vadd.f32 0.0, %v1423
      %1425 = vdwg.mxu0
      %v1426 = vsub.f32 %v1285, %v1371
      %v1427 = vsub.f32 %v1286, %v1374
      %v1428 = vsub.f32 %v1287, %v1377
      %v1429 = vsub.f32 %v1288, %v1380
      %v1430 = vsub.f32 %v1289, %v1383
      %v1431 = vsub.f32 %v1290, %v1386
      %v1432 = vmul.f32 %v1426, %v1409
      %v1433 = vmul.f32 %v1427, %v1412
      %v1434 = vmul.f32 %v1428, %v1415
      %v1435 = vmul.f32 %v1429, %v1418
      %v1436 = vmul.f32 %v1430, %v1421
      %v1437 = vmul.f32 %v1431, %v1424
      %v1438 = vld [vmem:[%s7] sm:$0xff]
      %v1439 = vld [vmem:[%s7 + $0x8] sm:$0xff]
      %v1440 = vld [vmem:[%s7 + $0x10] sm:$0xff]
      %v1441 = vld [vmem:[%s7 + $0x18] sm:$0xff]
      %v1442 = vld [vmem:[%s7 + $0x20] sm:$0xff]
      %v1443 = vld [vmem:[%s7 + $0x28] sm:$0xff]
      %1445 = vset.pattern.permute.xlu0 0
      %1446 = vperm.xlu0 %1445, %v1438
      %v1447 = vpop.permute.xlu0 %1446
      %1450 = vset.pattern.permute.xlu0 0
      %1451 = vperm.xlu0 %1450, %v1439
      %v1452 = vpop.permute.xlu0 %1451
      %1455 = vset.pattern.permute.xlu0 0
      %1456 = vperm.xlu0 %1455, %v1440
      %v1457 = vpop.permute.xlu0 %1456
      %1460 = vset.pattern.permute.xlu0 0
      %1461 = vperm.xlu0 %1460, %v1441
      %v1462 = vpop.permute.xlu0 %1461
      %1465 = vset.pattern.permute.xlu0 0
      %1466 = vperm.xlu0 %1465, %v1442
      %v1467 = vpop.permute.xlu0 %1466
      %1470 = vset.pattern.permute.xlu0 0
      %1471 = vperm.xlu0 %1470, %v1443
      %v1472 = vpop.permute.xlu0 %1471
      %v1474 = vmul.f32 %v1432, %v1447
      %v1475 = vmul.f32 %v1433, %v1452
      %v1476 = vmul.f32 %v1434, %v1457
      %v1477 = vmul.f32 %v1435, %v1462
      %v1478 = vmul.f32 %v1436, %v1467
      %v1479 = vmul.f32 %v1437, %v1472
      %v1480 = vld [vmem:[%s8] sm:$0xff]
      %v1481 = vld [vmem:[%s8 + $0x8] sm:$0xff]
      %v1482 = vld [vmem:[%s8 + $0x10] sm:$0xff]
      %v1483 = vld [vmem:[%s8 + $0x18] sm:$0xff]
      %v1484 = vld [vmem:[%s8 + $0x20] sm:$0xff]
      %v1485 = vld [vmem:[%s8 + $0x28] sm:$0xff]
      %1487 = vset.pattern.permute.xlu0 0
      %1488 = vperm.xlu0 %1487, %v1480
      %v1489 = vpop.permute.xlu0 %1488
      %1492 = vset.pattern.permute.xlu0 0
      %1493 = vperm.xlu0 %1492, %v1481
      %v1494 = vpop.permute.xlu0 %1493
      %1497 = vset.pattern.permute.xlu0 0
      %1498 = vperm.xlu0 %1497, %v1482
      %v1499 = vpop.permute.xlu0 %1498
      %1502 = vset.pattern.permute.xlu0 0
      %1503 = vperm.xlu0 %1502, %v1483
      %v1504 = vpop.permute.xlu0 %1503
      %1507 = vset.pattern.permute.xlu0 0
      %1508 = vperm.xlu0 %1507, %v1484
      %v1509 = vpop.permute.xlu0 %1508
      %1512 = vset.pattern.permute.xlu0 0
      %1513 = vperm.xlu0 %1512, %v1485
      %v1514 = vpop.permute.xlu0 %1513
      %v1516 = vadd.f32 %v1474, %v1489
      %v1517 = vadd.f32 %v1475, %v1494
      %v1518 = vadd.f32 %v1476, %v1499
      %v1519 = vadd.f32 %v1477, %v1504
      %v1520 = vadd.f32 %v1478, %v1509
      %v1521 = vadd.f32 %v1479, %v1514
      %v1522 = vld [vmem:[%s13] sm:$0x7]
      %s1523 = sld [smem:[#allocation2]]
      %v1524 = vstv %s1523
      %v1526 = vsel %vm811, %v1522, 0
      %1528 = vmatpush.msra.mxu0 0.0
      %1529 = vmatpush.msra.mxu0 0.0
      %1530 = vmatpush.msra.mxu0 0.0
      %1531 = vmatpush.msra.mxu0 0.0
      %1532 = vmatpush.msra.mxu0 0.0
      %1533 = vmatpush.msra.mxu0 0.0
      %1534 = vmatpush.msra.mxu0 0.0
      %1535 = vmatpush.msra.mxu0 0.0
      %1536 = vmatpush.msra.mxu0 0.0
      %1537 = vmatpush.msra.mxu0 0.0
      %1538 = vmatpush.msra.mxu0 %v1521
      %1539 = vmatpush.msra.mxu0 %v1520
      %1540 = vmatpush.msra.mxu0 %v1519
      %1541 = vmatpush.msra.mxu0 %v1518
      %1542 = vmatpush.msra.mxu0 %v1517
      %1543 = vmatpush.msra.mxu0 %v1516
      %1544 = vmatmul.f32.gmra.mxu0 %v1526
      %v1545 = vpop.f32.mrf.mxu0
      %v1546 = vadd.f32 %v1524, %v1545
      %1547 = vdwg.mxu0
      %vm1548 = vcmask 124928
      %1549 = vst.msk [vmem:[%s495] sm:$0x7] %vm1548, %v1546
      %p1550 = scmp.lt.s32.totalorder %s27, 1
      %s1551 = scalar_select %p1550, %s27, 1
      %s1552 = smul.addr %s1551, 4
      %s1553 = scalar_lea.vmem %s15, %s1552
      // Predicated region
      $region81: #{tpu_custom_call.1} parent=79 // pred_check
        %p1554 = pneg %p365
      $region82: #{tpu_custom_call.1} parent=79 // pred_check_branch
        %1556 = sbr.rel (%p1554) target = $region84
      $region83: #{tpu_custom_call.1} parent=79 // pred_region
        _
      $region84: #{tpu_custom_call.1} parent=79 // pred_fallthru
        _
    $region80: #{tpu_custom_call.1} parent=5 // pred_fallthru
      _
    %p1557 = scmp.le.s32.totalorder 2, %s22
    // Predicated region
    $region85: #{tpu_custom_call.1} parent=5 // pred_check
      %p1558 = pneg %p1557
    $region86: #{tpu_custom_call.1} parent=5 // pred_check_branch
      %1560 = sbr.rel (%p1558) target = $region88
    $region87: #{tpu_custom_call.1} parent=5 // pred_region
      %s1561 = ssub.s32 %s22, 2
      // Predicated region
      $region89: #{tpu_custom_call.1} parent=87 // pred_check
        %p1562 = pneg %p371
      $region90: #{tpu_custom_call.1} parent=87 // pred_check_branch
        %1564 = sbr.rel (%p1562) target = $region92
      $region91: #{tpu_custom_call.1} parent=87 // pred_region
        %p1565 = scmp.lt.s32.totalorder %s28, 1
        %s1566 = scalar_select %p1565, %s28, 1
        %s1567 = smul.addr %s1566, 4
        %s1568 = scalar_lea.vmem %s15, %s1567
      $region92: #{tpu_custom_call.1} parent=87 // pred_fallthru
        _
    $region88: #{tpu_custom_call.1} parent=5 // pred_fallthru
      _
  $region6: #{tpu_custom_call.1} parent=0 // loop_footer
    %s26 = sadd.s32 1, %s22
  $region7: #{tpu_custom_call.1} parent=0 // loop_footer_branch
    %21 = sbr.rel target = $region3
  $region8: #{tpu_custom_call.1} parent=0 // loop_exit
    _

</llo_original>
